<compile_context>
chip_gen: v7x
topology: tpu7x:2x2x1
jax: 0.10.0
libtpu: 0.0.40
codegen_flags: <defaults>
</compile_context>

<pallas_src>
import jax
import jax.numpy as jnp
from jax.experimental import pallas as pl
from jax.experimental.pallas import tpu as pltpu

_LANE = 128


def _round_up(x, m):
    return ((x + m - 1) // m) * m


def _sigmoid(x):
    # One EUP tanh + cheap VPU fma instead of exp + reciprocal.
    return 0.5 * jnp.tanh(0.5 * x) + 0.5


def _resident_spec(shape, index_map):
    """Constant-index weight operand: request single buffering (perf review item #2)."""
    try:
        return pl.BlockSpec(shape, index_map, pipeline_mode=pl.Buffered(1))
    except (TypeError, AttributeError):     # older jax without pipeline_mode / Buffered
        return pl.BlockSpec(shape, index_map)


# ---------------------------------------------------------------------------
# Generic tiled bf16 matmul (used for the hoisted x-path gate conv)
# ---------------------------------------------------------------------------

def _matmul_kernel(x_ref, w_ref, o_ref):
    o_ref[...] = jnp.dot(x_ref[...], w_ref[...],
                         preferred_element_type=jnp.float32).astype(o_ref.dtype)


def _matmul_row_tile(n_rows, k, n_cols):
    """MXU/sublane-aligned row tile sized against a ~24 MiB VMEM budget."""
    budget = 24 * 1024 * 1024
    w_bytes = k * n_cols * 2                                  # single-buffered bf16 weights
    per_row = 2 * (2 * k) + 2 * (2 * n_cols) + 4 * n_cols     # bf16 lhs/out (2 bufs) + f32 acc
    avail = max(budget - w_bytes, 128 * per_row)
    tile = min(1024, avail // per_row)
    tile = (tile // 256) * 256 if tile >= 256 else 128        # 256-mult (v6e/v7x MXU), else 128
    if n_rows >= 256:
        tile = min(tile, _round_up((n_rows + 1) // 2, 128))   # >= 2 row blocks (v7x megacore)
    return max(128, tile)


def _matmul_bf16(x, w, out_dtype=jnp.bfloat16):
    """x: (N, K) bf16, w: (K, C) bf16 -> (N, C) out_dtype with f32 accumulation."""
    n, k = x.shape
    n_cols = w.shape[1]
    tile = _matmul_row_tile(n, k, n_cols)
    n_pad = _round_up(n, tile)
    if n_pad != n:
        x = jnp.pad(x, ((0, n_pad - n), (0, 0)))
    out = pl.pallas_call(
        _matmul_kernel,
        out_shape=jax.ShapeDtypeStruct((n_pad, n_cols), out_dtype),
        grid_spec=pltpu.PrefetchScalarGridSpec(
            num_scalar_prefetch=0,
            grid=(n_pad // tile,),
            in_specs=[pl.BlockSpec((tile, k), lambda i: (i, 0)),
                      _resident_spec((k, n_cols), lambda i: (0, 0))],
            out_specs=pl.BlockSpec((tile, n_cols), lambda i: (i, 0)),
        ),
        compiler_params=pltpu.CompilerParams(
            dimension_semantics=("parallel",),
            vmem_limit_bytes=48 * 1024 * 1024),
    )(x, w)
    return out[:n] if n_pad != n else out


# ---------------------------------------------------------------------------
# XLA glue: K-trimmed NHWC im2col (built once per layer for the whole sequence)
# ---------------------------------------------------------------------------

def _im2col_nhwc(x, k, stride, pad):
    """x: (B, H, W, C) -> patches (B*Ho*Wo, k*k*C); column order (kh, kw, c)."""
    B, H, W, C = x.shape
    xp = jnp.pad(x, ((0, 0), (pad, pad), (pad, pad), (0, 0)))
    Ho = (H + 2 * pad - k) // stride + 1
    Wo = (W + 2 * pad - k) // stride + 1
    cols = [xp[:, kh:kh + stride * (Ho - 1) + 1:stride,
               kw:kw + stride * (Wo - 1) + 1:stride, :]
            for kh in range(k) for kw in range(k)]
    patches = jnp.concatenate(cols, axis=-1)
    return patches.reshape(B * Ho * Wo, k * k * C), Ho, Wo


# ---------------------------------------------------------------------------
# One ConvLSTM layer over the whole sequence (fused time recurrence)
# ---------------------------------------------------------------------------

def _lstm2d_layer_seq(x_seq, lp):
    """x_seq: (B, S, H, W, Cin) with TRUE input channels.
    Returns h_seq (B, S, Ho, Wo, m) bf16 and c_last (B, Ho, Wo, m) f32."""
    B, S, H, W, Cin = x_seq.shape
    m, m_p = lp["m"], lp["m_p"]
    Ho, Wo = (H + 1) // 2, (W + 1) // 2                  # k=3, stride=2, pad=1
    Hp, Wp = Ho + 2, Wo + 2
    npad = Hp * Wp                                       # flattened conv-padded plane
    lead = _round_up(Wp + 1, 8)                          # sublane-aligned h-image start in hbuf
    hbuf_rows = lead + npad + Wp + 1                     # leading/trailing zero guards

    # ---- x-path gates for ALL timesteps: one K-trimmed im2col + one big MXU matmul ----
    xcol, _, _ = _im2col_nhwc(
        x_seq.reshape(B * S, H, W, Cin).astype(jnp.bfloat16), 3, 2, 1)
    kx_p = lp["wx"].shape[0]
    if kx_p != xcol.shape[1]:
        xcol = jnp.pad(xcol, ((0, 0), (0, kx_p - xcol.shape[1])))   # lane-align K
    gx = _matmul_bf16(xcol, lp["wx"])                               # (B*S*Ho*Wo, 4*m_p) bf16
    gx = gx.reshape(B, S, Ho, Wo, 4 * m_p)
    gx = jnp.pad(gx, ((0, 0), (0, 0), (1, 1), (1, 1), (0, 0)))      # zero conv-padding ring
    gx = gx.reshape(B, S, npad, 4 * m_p)

    # ---- recurrent kernel: grid (B, S); 9 in-VMEM tap matmuls; h/c stay in VMEM ----
    def kernel(gx_ref, wh_ref, hseq_ref, clast_ref, hbuf, c_ref):
        t = pl.program_id(1)

        @pl.when(t == 0)
        def _():
            hbuf[...] = jnp.zeros_like(hbuf)    # zero state + conv-pad ring + guards
            c_ref[...] = jnp.zeros_like(c_ref)

        gates = gx_ref[0, 0].astype(jnp.float32)                    # (npad, 4*m_p)
        for kh in range(3):
            for kw in range(3):
                start = lead - Wp - 1 + kh * Wp + kw                # contiguous tap slice
                tap = hbuf[start:start + npad, :]                   # bf16 (npad, m_p)
                wt = wh_ref[(kh * 3 + kw) * m_p:(kh * 3 + kw + 1) * m_p, :]
                gates = gates + jnp.dot(tap, wt,
                                        preferred_element_type=jnp.float32)

        i = _sigmoid(gates[:, 0 * m_p:1 * m_p])
        f = _sigmoid(gates[:, 1 * m_p:2 * m_p])
        g = jnp.tanh(gates[:, 2 * m_p:3 * m_p])
        o = _sigmoid(gates[:, 3 * m_p:4 * m_p])
        c_new = f * c_ref[...] + i * g
        h_new = o * jnp.tanh(c_new)

        # Conv-padding-ring rows compute garbage (discarded); zero them so next step's
        # taps keep reading true zeros from the ring.
        q = jax.lax.broadcasted_iota(jnp.int32, (npad, 1), 0)
        ip, jp = q // Wp, q % Wp
        interior = (ip >= 1) & (ip <= Ho) & (jp >= 1) & (jp <= Wo)
        c_new = jnp.where(interior, c_new, 0.0)
        h_new = jnp.where(interior, h_new, 0.0)

        c_ref[...] = c_new
        hbuf[lead:lead + npad, :] = h_new.astype(jnp.bfloat16)      # recurrent state (bf16)
        hseq_ref[0, 0] = h_new.astype(hseq_ref.dtype)
        clast_ref[0] = c_new

    h_seq, c_last = pl.pallas_call(
        kernel,
        out_shape=(jax.ShapeDtypeStruct((B, S, npad, m_p), jnp.bfloat16),
                   jax.ShapeDtypeStruct((B, npad, m_p), jnp.float32)),
        grid_spec=pltpu.PrefetchScalarGridSpec(
            num_scalar_prefetch=0,
            grid=(B, S),
            in_specs=[
                pl.BlockSpec((1, 1, npad, 4 * m_p), lambda b, t: (b, t, 0, 0)),
                _resident_spec((9 * m_p, 4 * m_p), lambda b, t: (0, 0)),
            ],
            out_specs=(pl.BlockSpec((1, 1, npad, m_p), lambda b, t: (b, t, 0, 0)),
                       pl.BlockSpec((1, npad, m_p), lambda b, t: (b, 0, 0))),
            scratch_shapes=[pltpu.VMEM((hbuf_rows, m_p), jnp.bfloat16),   # padded h image
                            pltpu.VMEM((npad, m_p), jnp.float32)],        # cell state
        ),
        compiler_params=pltpu.CompilerParams(
            dimension_semantics=("parallel", "arbitrary"),
            vmem_limit_bytes=32 * 1024 * 1024),
    )(gx, lp["wh"])

    h_seq = h_seq.reshape(B, S, Hp, Wp, m_p)[:, :, 1:1 + Ho, 1:1 + Wo, :m]
    c_last = c_last.reshape(B, Hp, Wp, m_p)[:, 1:1 + Ho, 1:1 + Wo, :m]
    return h_seq, c_last


# ---------------------------------------------------------------------------
# Classifier head
# ---------------------------------------------------------------------------

def _linear_kernel(x_ref, w_ref, b_ref, o_ref):
    o_ref[...] = (jnp.dot(x_ref[...], w_ref[...],
                          preferred_element_type=jnp.float32)
                  + b_ref[...]).astype(o_ref.dtype)


_VMEM_SPEC = pl.BlockSpec(memory_space=pltpu.MemorySpace.VMEM)


def _linear(x, w_t, b_row):
    # TODO(synk): add a row/col grid if in_features * cls stops fitting whole-array VMEM.
    n = x.shape[0]
    cls_p = w_t.shape[1]
    return pl.pallas_call(
        _linear_kernel,
        out_shape=jax.ShapeDtypeStruct((n, cls_p), jnp.float32),
        in_specs=[_VMEM_SPEC] * 3,
        out_specs=_VMEM_SPEC,
    )(x, w_t, b_row)


# ---------------------------------------------------------------------------
# Parameter packing / init
# ---------------------------------------------------------------------------

def _pack_x_weights(wx, c_in, m, m_p):
    """wx: (4m, c_in, 3, 3) OIHW, gate-major out channels [i|f|g|o]
    -> (round_up(9*c_in, 128), 4*m_p) bf16; rows ordered (kh, kw, c) like _im2col_nhwc."""
    kx = 9 * c_in
    kx_p = _round_up(kx, _LANE)
    w = jnp.transpose(wx, (2, 3, 1, 0)).reshape(kx, 4, m)
    w = jnp.pad(w, ((0, kx_p - kx), (0, 0), (0, m_p - m)))
    return w.reshape(kx_p, 4 * m_p).astype(jnp.bfloat16)


def _pack_h_weights(wh, m, m_p):
    """wh: (4m, m, 3, 3) OIHW -> (9*m_p, 4*m_p) bf16; row block `tap = kh*3+kw` holds the
    lane-padded input channels of that tap; gate columns padded to 128 lanes each."""
    w = jnp.transpose(wh, (2, 3, 1, 0))                          # (3, 3, m, 4m)
    w = jnp.pad(w, ((0, 0), (0, 0), (0, m_p - m), (0, 0)))
    w = w.reshape(9 * m_p, 4, m)
    w = jnp.pad(w, ((0, 0), (0, 0), (0, m_p - m)))
    return w.reshape(9 * m_p, 4 * m_p).astype(jnp.bfloat16)


def init_params(key, in_channel, cls_size, in_size, num_layer):
    params = {"lstm": []}
    c_in = in_channel
    num = in_size
    for _ in range(num_layer):
        m = c_in * 2
        m_p = _round_up(m, _LANE)
        key, k1, k2 = jax.random.split(key, 3)
        wx = jax.random.normal(k1, (4 * m, c_in, 3, 3), jnp.float32) * 0.1
        wh = jax.random.normal(k2, (4 * m, m, 3, 3), jnp.float32) * 0.1
        params["lstm"].append({
            "wx": _pack_x_weights(wx, c_in, m, m_p),
            "wh": _pack_h_weights(wh, m, m_p),
            "m": m, "m_p": m_p,
        })
        c_in = m
        num = (num + 1) // 2

    key, k1, k2 = jax.random.split(key, 3)
    in_features = c_in * num * num
    cls_p = _round_up(cls_size, _LANE)
    fc_w = jax.random.normal(k1, (cls_size, in_features), jnp.float32) * 0.05
    fc_b = jax.random.normal(k2, (cls_size,), jnp.float32) * 0.05
    params["fc_w_t"] = jnp.pad(fc_w.T, ((0, 0), (0, cls_p - cls_size))).astype(jnp.bfloat16)
    params["fc_b"] = jnp.pad(fc_b, (0, cls_p - cls_size)).reshape(1, -1)
    params["cls"] = cls_size
    return params


# ---------------------------------------------------------------------------
# Forward
# ---------------------------------------------------------------------------

def lstm2d_forward(params, x):
    """x: (B, S, C, H, W) f32 -> (logits (B, cls), memorys: list of (h, c) NHWC)."""
    b = x.shape[0]
    x_seq = jnp.transpose(x, (0, 1, 3, 4, 2))        # single up-front NCHW -> NHWC transpose
    memorys = []
    cur = x_seq
    for lp in params["lstm"]:
        h_seq, c_last = _lstm2d_layer_seq(cur, lp)
        memorys.append((h_seq[:, -1].astype(jnp.float32), c_last))
        cur = h_seq                                   # (B, S, Ho, Wo, m) bf16, true channels

    # Final-timestep features of the last layer, NCHW flatten order to match the reference fc.
    feat = jnp.transpose(cur[:, -1], (0, 3, 1, 2)).reshape(b, -1).astype(jnp.bfloat16)
    logits = _linear(feat, params["fc_w_t"], params["fc_b"])[:, :params["cls"]]
    return logits, memorys


# ---------------------------------------------------------------------------
# Demo
# ---------------------------------------------------------------------------

if __name__ == "__main__":
    B, S = 2, 8
    in_channel, in_size = 4, 16
    num_layer, cls_size = 2, 10

    key = jax.random.PRNGKey(0)
    key, kx = jax.random.split(key)
    x = jax.random.normal(kx, (B, S, in_channel, in_size, in_size), jnp.float32)

    params = init_params(key, in_channel, cls_size, in_size, num_layer)

    logits, memorys = lstm2d_forward(params, x)
    jax.block_until_ready(logits)
    for h, c in memorys:
        jax.block_until_ready(h)
        jax.block_until_ready(c)

    assert logits.shape == (B, cls_size)
    assert bool(jnp.isfinite(logits).all())
    print("KERNEL_OK")
</pallas_src>

<mosaic_0001>
module attributes {stable_mosaic.version = 11 : i64} {
  func.func @_matmul_kernel(%arg0: i32, %arg1: memref<512x128xbf16, #tpu.memory_space<vmem>>, %arg2: memref<128x512xbf16, #tpu.memory_space<vmem>>, %arg3: memref<512x512xbf16, #tpu.memory_space<vmem>>) attributes {dimension_semantics = [#tpu.dimension_semantics<parallel>], iteration_bounds = array<i64: 2>, scalar_prefetch = 0 : i64, scratch_operands = 0 : i64, tpu.core_type = #tpu.core_type<tc>, window_params = [{transform_indices = @transform_0, window_bounds = array<i64: 512, 128>}, {pipeline_mode = #tpu.pipeline_mode<synchronous>, transform_indices = @transform_1, window_bounds = array<i64: 128, 512>}, {transform_indices = @transform_2, window_bounds = array<i64: 512, 512>}]} {
    %c0 = arith.constant 0 : index
    %c0_0 = arith.constant 0 : index
    %0 = vector.load %arg1[%c0, %c0_0] : memref<512x128xbf16, #tpu.memory_space<vmem>>, vector<512x128xbf16>
    %c0_1 = arith.constant 0 : index
    %c0_2 = arith.constant 0 : index
    %1 = vector.load %arg2[%c0_1, %c0_2] : memref<128x512xbf16, #tpu.memory_space<vmem>>, vector<128x512xbf16>
    %cst = arith.constant dense<0.000000e+00> : vector<512x512xf32>
    %2 = tpu.matmul %0, %1, %cst {dimension_numbers = #tpu.dot_dimension_numbers<[1], [0], [0], [1], [0, 0, 1, 1], [], []>} : vector<512x128xbf16>, vector<128x512xbf16>, vector<512x512xf32> -> vector<512x512xf32>
    %3 = arith.truncf %2 : vector<512x512xf32> to vector<512x512xbf16>
    %c0_3 = arith.constant 0 : index
    %c0_4 = arith.constant 0 : index
    %4 = vector.load %arg3[%c0_3, %c0_4] : memref<512x512xbf16, #tpu.memory_space<vmem>>, vector<512x512xbf16>
    tpu.vector_store %arg3[%c0_3, %c0_4], %3 {strides = array<i32>} : memref<512x512xbf16, #tpu.memory_space<vmem>>, vector<512x512xbf16>,
    return
  }
  func.func @transform_0(%arg0: i32) -> (i32, i32) {
    %c0_i32 = arith.constant 0 : i32
    %c0_i32_0 = arith.constant 0 : i32
    return %arg0, %c0_i32 : i32, i32
  }
  func.func @transform_1(%arg0: i32) -> (i32, i32) {
    %c0_i32 = arith.constant 0 : i32
    %c0_i32_0 = arith.constant 0 : i32
    %c0_i32_1 = arith.constant 0 : i32
    return %c0_i32, %c0_i32_0 : i32, i32
  }
  func.func @transform_2(%arg0: i32) -> (i32, i32) {
    %c0_i32 = arith.constant 0 : i32
    %c0_i32_0 = arith.constant 0 : i32
    return %arg0, %c0_i32 : i32, i32
  }
}

</mosaic_0001>

<llo_original>
// kernel: tpu_custom_call.1
$region0: #{tpu_custom_call.1}
  #allocation0 [shape = 'u32[]', space=smem, size = 0x4, offset = 0x4, fixed_abs, tag = 'smem constant byte address 0x4 - core index']
  #allocation1 [shape = 'u32[144,128]{1,0:T(1,128)}', space=vmem, size = 0x12000, scoped, tag = 'internal scratch']
  %s0 = inlined_call_operand.hbm [shape: bf16[1024,128], index: 0, kind: input, shape index: {}]
  %s1 = inlined_call_operand.hbm [shape: bf16[128,512], index: 1, kind: input, shape index: {}]
  %s2 = inlined_call_operand.hbm [shape: bf16[1024,512], index: 2, kind: output, shape index: {}]
  %s3 = sld [smem:[#allocation0]]
  $region49: #{tpu_custom_call.1} parent=0
    _
  %s5 = ssub.s32 1, %s3
  %s6 = scalar_select 0, %s5, %s3
  $region1: #{tpu_custom_call.1} parent=0
    #allocation2 [shape = 'u8[262144]{0}', space=vmem, size = 0x40000, scoped, tag = 'input window, operand 0']
    #allocation3 [shape = 's32[2]{0}', space=sflag, size = 0x8, scoped, tag = 'scoped memory for tpu_custom_call.1']
    #allocation4 [shape = 's32[2]{0}', space=sflag, size = 0x8, scoped, tag = 'scoped memory for tpu_custom_call.1']
    #allocation5 [shape = 'u8[131072]{0}', space=vmem, size = 0x20000, scoped, tag = 'input window, operand 1, single buffered']
    #allocation6 [shape = 's32[1]{0}', space=sflag, size = 0x4, scoped, tag = 'scoped memory for tpu_custom_call.1']
    #allocation7 [shape = 'u8[1048576]{0}', space=vmem, size = 0x100000, scoped, tag = 'output window, operand 0']
    %7 = vsyncpa [#allocation3], 0
    %s8 = scalar_lea.sflag [#allocation3], 1
    %9 = vsyncpa %s8, 0
    %10 = vsyncpa [#allocation6], 0
    %11 = vsyncpa [#allocation4], 0
    %s12 = scalar_lea.sflag [#allocation4], 1
    %13 = vsyncpa %s12, 0
    loop: start=0, step=1, limit=4
    $region2: #{tpu_custom_call.1} parent=1 // loop_pre_header
      _
    $region3: #{tpu_custom_call.1} parent=1 // loop_header
      %s15 = sphi 0, %s19
      %p16 = scmp.ge.s32.totalorder %s15, 4
      %s25 = sphi 0, %s27
      %s28 = sphi 0, %s25
      %s29 = sphi 0, %s28
      %s45 = sphi 0, %s29
      %s49 = sphi 0, %s49
      %s51 = sphi 0, %s49
      %s52 = sphi 0, %s51
      %s66 = sphi 0, %s52
      %s72 = sphi 0, %s74
      %s75 = sphi 0, %s72
      %s76 = sphi 0, %s75
      %s92 = sphi 0, %s76
    $region4: #{tpu_custom_call.1} parent=1 // loop_header_branch
      %18 = sbr.rel (%p16) target = $region8
    $region5: #{tpu_custom_call.1} parent=1 // loop_body
      %s20 = ssub.s32 %s15, 1
      %s21 = ssub.s32 %s15, 2
      %s22 = sadd.s32 %s15, 1
      %s23 = ssub.s32 %s15, %s22
      %p24 = scmp.eq.s32.totalorder %s23, 0
      %s26 = sadd.s32 %s25, 1
      %s27 = scalar_select %p24, %s25, %s26
      %p30 = pneg %p24
      %p31 = scmp.eq.s32.totalorder %s15, 1
      %p32 = por %p30, %p31
      %p33 = scmp.ne.s32.totalorder %s25, %s28
      %p34 = scmp.eq.s32.totalorder %s15, 0
      %p35 = por %p33, %p34
      %p36 = scmp.ne.s32.totalorder %s25, %s28
      %p37 = scmp.eq.s32.totalorder %s20, 1
      %p38 = por %p36, %p37
      %p39 = scmp.ne.s32.totalorder %s28, %s29
      %p40 = scmp.eq.s32.totalorder %s20, 0
      %p41 = por %p39, %p40
      %p42 = scmp.ne.s32.totalorder %s28, %s29
      %p43 = scmp.eq.s32.totalorder %s21, 1
      %p44 = por %p42, %p43
      %p46 = scmp.ne.s32.totalorder %s29, %s45
      %p47 = scmp.eq.s32.totalorder %s21, 0
      %p48 = por %p46, %p47
      %s50 = sadd.s32 %s49, 1
      %p53 = scmp.eq.s32.totalorder %s15, 1
      %p54 = scmp.ne.s32.totalorder %s49, %s51
      %p55 = scmp.eq.s32.totalorder %s15, 0
      %p56 = por %p54, %p55
      %p57 = scmp.ne.s32.totalorder %s49, %s51
      %p58 = scmp.eq.s32.totalorder %s20, 1
      %p59 = por %p57, %p58
      %p60 = scmp.ne.s32.totalorder %s51, %s52
      %p61 = scmp.eq.s32.totalorder %s20, 0
      %p62 = por %p60, %p61
      %p63 = scmp.ne.s32.totalorder %s51, %s52
      %p64 = scmp.eq.s32.totalorder %s21, 1
      %p65 = por %p63, %p64
      %p67 = scmp.ne.s32.totalorder %s52, %s66
      %p68 = scmp.eq.s32.totalorder %s21, 0
      %p69 = por %p67, %p68
      %s70 = ssub.s32 %s15, %s22
      %p71 = scmp.eq.s32.totalorder %s70, 0
      %s73 = sadd.s32 %s72, 1
      %s74 = scalar_select %p71, %s72, %s73
      %p77 = pneg %p71
      %p78 = scmp.eq.s32.totalorder %s15, 1
      %p79 = por %p77, %p78
      %p80 = scmp.ne.s32.totalorder %s72, %s75
      %p81 = scmp.eq.s32.totalorder %s15, 0
      %p82 = por %p80, %p81
      %p83 = scmp.ne.s32.totalorder %s72, %s75
      %p84 = scmp.eq.s32.totalorder %s20, 1
      %p85 = por %p83, %p84
      %p86 = scmp.ne.s32.totalorder %s75, %s76
      %p87 = scmp.eq.s32.totalorder %s20, 0
      %p88 = por %p86, %p87
      %p89 = scmp.ne.s32.totalorder %s75, %s76
      %p90 = scmp.eq.s32.totalorder %s21, 1
      %p91 = por %p89, %p90
      %p93 = scmp.ne.s32.totalorder %s76, %s92
      %p94 = scmp.eq.s32.totalorder %s21, 0
      %p95 = por %p93, %p94
      %p96 = scmp.le.s32.totalorder 1, %s15
      %p97 = scmp.lt.s32.totalorder %s15, 3
      %p98 = pnand %p96, %p97
      %p99 = pneg %p98
      // Predicated region
      $region9: #{tpu_custom_call.1} parent=5 // pred_check
        _
      $region10: #{tpu_custom_call.1} parent=5 // pred_check_branch
        %101 = sbr.rel (%p98) target = $region12
      $region11: #{tpu_custom_call.1} parent=5 // pred_region
        %s102 = ssub.s32 %s15, 1
        // Predicated region
        $region13: #{tpu_custom_call.1} parent=11 // pred_check
          %p103 = pneg %p62
        $region14: #{tpu_custom_call.1} parent=11 // pred_check_branch
          %105 = sbr.rel (%p103) target = $region16
        $region15: #{tpu_custom_call.1} parent=11 // pred_region
          %s107 = ssub.s32 4096, 4096
          %108 = vsyncadd [#allocation6], %s107
          %s109 = sshll.u32 [#allocation5], 4
          %s110 = int_to_ptr.vmem [resolvable:$true] %s109
          %115 = dma.hbm_to_vmem [thread:$0]  %s1, 4096, %s110, [#allocation6], 256, 256, 16
        $region16: #{tpu_custom_call.1} parent=11 // pred_fallthru
          _
      $region12: #{tpu_custom_call.1} parent=5 // pred_fallthru
        _
      %p116 = scmp.lt.s32.totalorder %s15, 2
      // Predicated region
      $region17: #{tpu_custom_call.1} parent=5 // pred_check
        %p117 = pneg %p116
      $region18: #{tpu_custom_call.1} parent=5 // pred_check_branch
        %119 = sbr.rel (%p117) target = $region20
      $region19: #{tpu_custom_call.1} parent=5 // pred_region
        // Predicated region
        $region21: #{tpu_custom_call.1} parent=19 // pred_check
          %p120 = pneg %p35
        $region22: #{tpu_custom_call.1} parent=19 // pred_check_branch
          %122 = sbr.rel (%p120) target = $region24
        $region23: #{tpu_custom_call.1} parent=19 // pred_region
          %s123 = sand.u32 %s25, 1
          %s124 = scalar_lea.sflag [#allocation3], %s123
          %s125 = sand.u32 %s25, 1
          %s126 = smul.addr %s125, 256
          %s127 = scalar_lea.vmem [#allocation2], %s126
          %s128 = smul.u32 64, %s15
          %s130 = ssub.s32 4096, 4096
          %131 = vsyncadd %s124, %s130
          %s132 = smul.addr %s128, 64
          %s133 = scalar_lea.hbm %s0, %s132
          %s134 = sshll.u32 %s127, 4
          %s135 = int_to_ptr.vmem [resolvable:$true] %s134
          %140 = dma.hbm_to_vmem [thread:$0]  %s133, 4096, %s135, %s124, 64, 64, 4
        $region24: #{tpu_custom_call.1} parent=19 // pred_fallthru
          _
      $region20: #{tpu_custom_call.1} parent=5 // pred_fallthru
        _
      %p141 = scmp.le.s32.totalorder 1, %s15
      %p142 = scmp.lt.s32.totalorder %s15, 3
      %p143 = pnand %p141, %p142
      %p144 = pneg %p143
      // Predicated region
      $region25: #{tpu_custom_call.1} parent=5 // pred_check
        _
      $region26: #{tpu_custom_call.1} parent=5 // pred_check_branch
        %146 = sbr.rel (%p143) target = $region28
      $region27: #{tpu_custom_call.1} parent=5 // pred_region
        %s147 = ssub.s32 %s15, 1
        %s148 = sand.u32 %s28, 1
        %s149 = scalar_lea.sflag [#allocation3], %s148
        %s150 = sand.u32 %s28, 1
        %s151 = smul.addr %s150, 256
        %s152 = scalar_lea.vmem [#allocation2], %s151
        // Predicated region
        $region29: #{tpu_custom_call.1} parent=27 // pred_check
          %p153 = pneg %p41
        $region30: #{tpu_custom_call.1} parent=27 // pred_check_branch
          %155 = sbr.rel (%p153) target = $region32
        $region31: #{tpu_custom_call.1} parent=27 // pred_region
          %156 = dma.done %s149, 4096
        $region32: #{tpu_custom_call.1} parent=27 // pred_fallthru
          _
        // Predicated region
        $region33: #{tpu_custom_call.1} parent=27 // pred_check
          %p157 = pneg %p62
        $region34: #{tpu_custom_call.1} parent=27 // pred_check_branch
          %159 = sbr.rel (%p157) target = $region36
        $region35: #{tpu_custom_call.1} parent=27 // pred_region
          %160 = dma.done [#allocation6], 4096
        $region36: #{tpu_custom_call.1} parent=27 // pred_fallthru
          _
        %s161 = sand.u32 %s28, 1
        %s162 = scalar_lea.sflag [#allocation3], %s161
        %s163 = sand.u32 %s28, 1
        %s164 = smul.addr %s163, 256
        %s165 = scalar_lea.vmem [#allocation2], %s164
        %p166 = pneg %p41
        %p167 = pneg %p38
        %p168 = pneg %p62
        %p169 = pneg %p59
        %p170 = pneg %p88
        %p171 = pneg %p85
        %s172 = sand.u32 %s75, 1
        %s173 = scalar_lea.sflag [#allocation4], %s172
        %s174 = sand.u32 %s75, 1
        %s175 = smul.addr %s174, 1024
        %s176 = scalar_lea.vmem [#allocation7], %s175
        %s177 = smul.u32 64, %s20
        %s178 = smul.u32 64, %s20
        %v180 = vld [vmem:[%s152] sm:$0xf]
        %v181 = vld [vmem:[%s152 + $0x4] sm:$0xf]
        %v182 = vld [vmem:[%s152 + $0x8] sm:$0xf]
        %v183 = vld [vmem:[%s152 + $0xc] sm:$0xf]
        %v184 = vld [vmem:[%s152 + $0x10] sm:$0xf]
        %v185 = vld [vmem:[%s152 + $0x14] sm:$0xf]
        %v186 = vld [vmem:[%s152 + $0x18] sm:$0xf]
        %v187 = vld [vmem:[%s152 + $0x1c] sm:$0xf]
        %v188 = vld [vmem:[%s152 + $0x20] sm:$0xf]
        %v189 = vld [vmem:[%s152 + $0x24] sm:$0xf]
        %v190 = vld [vmem:[%s152 + $0x28] sm:$0xf]
        %v191 = vld [vmem:[%s152 + $0x2c] sm:$0xf]
        %v192 = vld [vmem:[%s152 + $0x30] sm:$0xf]
        %v193 = vld [vmem:[%s152 + $0x34] sm:$0xf]
        %v194 = vld [vmem:[%s152 + $0x38] sm:$0xf]
        %v195 = vld [vmem:[%s152 + $0x3c] sm:$0xf]
        %v196 = vld [vmem:[%s152 + $0x40] sm:$0xf]
        %v197 = vld [vmem:[%s152 + $0x44] sm:$0xf]
        %v198 = vld [vmem:[%s152 + $0x48] sm:$0xf]
        %v199 = vld [vmem:[%s152 + $0x4c] sm:$0xf]
        %v200 = vld [vmem:[%s152 + $0x50] sm:$0xf]
        %v201 = vld [vmem:[%s152 + $0x54] sm:$0xf]
        %v202 = vld [vmem:[%s152 + $0x58] sm:$0xf]
        %v203 = vld [vmem:[%s152 + $0x5c] sm:$0xf]
        %v204 = vld [vmem:[%s152 + $0x60] sm:$0xf]
        %v205 = vld [vmem:[%s152 + $0x64] sm:$0xf]
        %v206 = vld [vmem:[%s152 + $0x68] sm:$0xf]
        %v207 = vld [vmem:[%s152 + $0x6c] sm:$0xf]
        %v208 = vld [vmem:[%s152 + $0x70] sm:$0xf]
        %v209 = vld [vmem:[%s152 + $0x74] sm:$0xf]
        %v210 = vld [vmem:[%s152 + $0x78] sm:$0xf]
        %v211 = vld [vmem:[%s152 + $0x7c] sm:$0xf]
        %v212 = vld [vmem:[%s152 + $0x80] sm:$0xf]
        %v213 = vld [vmem:[%s152 + $0x84] sm:$0xf]
        %v214 = vld [vmem:[%s152 + $0x88] sm:$0xf]
        %v215 = vld [vmem:[%s152 + $0x8c] sm:$0xf]
        %v216 = vld [vmem:[%s152 + $0x90] sm:$0xf]
        %v217 = vld [vmem:[%s152 + $0x94] sm:$0xf]
        %v218 = vld [vmem:[%s152 + $0x98] sm:$0xf]
        %v219 = vld [vmem:[%s152 + $0x9c] sm:$0xf]
        %v220 = vld [vmem:[%s152 + $0xa0] sm:$0xf]
        %v221 = vld [vmem:[%s152 + $0xa4] sm:$0xf]
        %v222 = vld [vmem:[%s152 + $0xa8] sm:$0xf]
        %v223 = vld [vmem:[%s152 + $0xac] sm:$0xf]
        %v224 = vld [vmem:[%s152 + $0xb0] sm:$0xf]
        %v225 = vld [vmem:[%s152 + $0xb4] sm:$0xf]
        %v226 = vld [vmem:[%s152 + $0xb8] sm:$0xf]
        %v227 = vld [vmem:[%s152 + $0xbc] sm:$0xf]
        %v228 = vld [vmem:[%s152 + $0xc0] sm:$0xf]
        %v229 = vld [vmem:[%s152 + $0xc4] sm:$0xf]
        %v230 = vld [vmem:[%s152 + $0xc8] sm:$0xf]
        %v231 = vld [vmem:[%s152 + $0xcc] sm:$0xf]
        %v232 = vld [vmem:[%s152 + $0xd0] sm:$0xf]
        %v233 = vld [vmem:[%s152 + $0xd4] sm:$0xf]
        %v234 = vld [vmem:[%s152 + $0xd8] sm:$0xf]
        %v235 = vld [vmem:[%s152 + $0xdc] sm:$0xf]
        %v236 = vld [vmem:[%s152 + $0xe0] sm:$0xf]
        %v237 = vld [vmem:[%s152 + $0xe4] sm:$0xf]
        %v238 = vld [vmem:[%s152 + $0xe8] sm:$0xf]
        %v239 = vld [vmem:[%s152 + $0xec] sm:$0xf]
        %v240 = vld [vmem:[%s152 + $0xf0] sm:$0xf]
        %v241 = vld [vmem:[%s152 + $0xf4] sm:$0xf]
        %v242 = vld [vmem:[%s152 + $0xf8] sm:$0xf]
        %v243 = vld [vmem:[%s152 + $0xfc] sm:$0xf]
        %v244 = vld [vmem:[#allocation5] sm:$0xff]
        %v245 = vld [vmem:[#allocation5 + $0x8] sm:$0xff]
        %v246 = vld [vmem:[#allocation5 + $0x10] sm:$0xff]
        %v247 = vld [vmem:[#allocation5 + $0x18] sm:$0xff]
        %v248 = vld [vmem:[#allocation5 + $0x20] sm:$0xff]
        %v249 = vld [vmem:[#allocation5 + $0x28] sm:$0xff]
        %v250 = vld [vmem:[#allocation5 + $0x30] sm:$0xff]
        %v251 = vld [vmem:[#allocation5 + $0x38] sm:$0xff]
        %v252 = vld [vmem:[#allocation5 + $0x40] sm:$0xff]
        %v253 = vld [vmem:[#allocation5 + $0x48] sm:$0xff]
        %v254 = vld [vmem:[#allocation5 + $0x50] sm:$0xff]
        %v255 = vld [vmem:[#allocation5 + $0x58] sm:$0xff]
        %v256 = vld [vmem:[#allocation5 + $0x60] sm:$0xff]
        %v257 = vld [vmem:[#allocation5 + $0x68] sm:$0xff]
        %v258 = vld [vmem:[#allocation5 + $0x70] sm:$0xff]
        %v259 = vld [vmem:[#allocation5 + $0x78] sm:$0xff]
        %v260 = vld [vmem:[#allocation5 + $0x80] sm:$0xff]
        %v261 = vld [vmem:[#allocation5 + $0x88] sm:$0xff]
        %v262 = vld [vmem:[#allocation5 + $0x90] sm:$0xff]
        %v263 = vld [vmem:[#allocation5 + $0x98] sm:$0xff]
        %v264 = vld [vmem:[#allocation5 + $0xa0] sm:$0xff]
        %v265 = vld [vmem:[#allocation5 + $0xa8] sm:$0xff]
        %v266 = vld [vmem:[#allocation5 + $0xb0] sm:$0xff]
        %v267 = vld [vmem:[#allocation5 + $0xb8] sm:$0xff]
        %v268 = vld [vmem:[#allocation5 + $0xc0] sm:$0xff]
        %v269 = vld [vmem:[#allocation5 + $0xc8] sm:$0xff]
        %v270 = vld [vmem:[#allocation5 + $0xd0] sm:$0xff]
        %v271 = vld [vmem:[#allocation5 + $0xd8] sm:$0xff]
        %v272 = vld [vmem:[#allocation5 + $0xe0] sm:$0xff]
        %v273 = vld [vmem:[#allocation5 + $0xe8] sm:$0xff]
        %v274 = vld [vmem:[#allocation5 + $0xf0] sm:$0xff]
        %v275 = vld [vmem:[#allocation5 + $0xf8] sm:$0xff]
        %v340 = vunpack.c.l.b16 %v180
        %v341 = vunpack.c.l.b16 %v181
        %v342 = vunpack.c.l.b16 %v182
        %v343 = vunpack.c.l.b16 %v183
        %v344 = vunpack.c.l.b16 %v184
        %v345 = vunpack.c.l.b16 %v185
        %v346 = vunpack.c.l.b16 %v186
        %v347 = vunpack.c.l.b16 %v187
        %v348 = vunpack.c.l.b16 %v188
        %v349 = vunpack.c.l.b16 %v189
        %v350 = vunpack.c.l.b16 %v190
        %v351 = vunpack.c.l.b16 %v191
        %v352 = vunpack.c.l.b16 %v192
        %v353 = vunpack.c.l.b16 %v193
        %v354 = vunpack.c.l.b16 %v194
        %v355 = vunpack.c.l.b16 %v195
        %v356 = vunpack.c.l.b16 %v196
        %v357 = vunpack.c.l.b16 %v197
        %v358 = vunpack.c.l.b16 %v198
        %v359 = vunpack.c.l.b16 %v199
        %v360 = vunpack.c.l.b16 %v200
        %v361 = vunpack.c.l.b16 %v201
        %v362 = vunpack.c.l.b16 %v202
        %v363 = vunpack.c.l.b16 %v203
        %v364 = vunpack.c.l.b16 %v204
        %v365 = vunpack.c.l.b16 %v205
        %v366 = vunpack.c.l.b16 %v206
        %v367 = vunpack.c.l.b16 %v207
        %v368 = vunpack.c.l.b16 %v208
        %v369 = vunpack.c.l.b16 %v209
        %v370 = vunpack.c.l.b16 %v210
        %v371 = vunpack.c.l.b16 %v211
        %v372 = vunpack.c.l.b16 %v212
        %v373 = vunpack.c.l.b16 %v213
        %v374 = vunpack.c.l.b16 %v214
        %v375 = vunpack.c.l.b16 %v215
        %v376 = vunpack.c.l.b16 %v216
        %v377 = vunpack.c.l.b16 %v217
        %v378 = vunpack.c.l.b16 %v218
        %v379 = vunpack.c.l.b16 %v219
        %v380 = vunpack.c.l.b16 %v220
        %v381 = vunpack.c.l.b16 %v221
        %v382 = vunpack.c.l.b16 %v222
        %v383 = vunpack.c.l.b16 %v223
        %v384 = vunpack.c.l.b16 %v224
        %v385 = vunpack.c.l.b16 %v225
        %v386 = vunpack.c.l.b16 %v226
        %v387 = vunpack.c.l.b16 %v227
        %v388 = vunpack.c.l.b16 %v228
        %v389 = vunpack.c.l.b16 %v229
        %v390 = vunpack.c.l.b16 %v230
        %v391 = vunpack.c.l.b16 %v231
        %v392 = vunpack.c.l.b16 %v232
        %v393 = vunpack.c.l.b16 %v233
        %v394 = vunpack.c.l.b16 %v234
        %v395 = vunpack.c.l.b16 %v235
        %v396 = vunpack.c.l.b16 %v236
        %v397 = vunpack.c.l.b16 %v237
        %v398 = vunpack.c.l.b16 %v238
        %v399 = vunpack.c.l.b16 %v239
        %v400 = vunpack.c.l.b16 %v240
        %v401 = vunpack.c.l.b16 %v241
        %v402 = vunpack.c.l.b16 %v242
        %v403 = vunpack.c.l.b16 %v243
        %v404 = vpack.c.b16 %v341, %v340
        %v405 = vpack.c.b16 %v343, %v342
        %v406 = vpack.c.b16 %v345, %v344
        %v407 = vpack.c.b16 %v347, %v346
        %v408 = vpack.c.b16 %v349, %v348
        %v409 = vpack.c.b16 %v351, %v350
        %v410 = vpack.c.b16 %v353, %v352
        %v411 = vpack.c.b16 %v355, %v354
        %v412 = vpack.c.b16 %v357, %v356
        %v413 = vpack.c.b16 %v359, %v358
        %v414 = vpack.c.b16 %v361, %v360
        %v415 = vpack.c.b16 %v363, %v362
        %v416 = vpack.c.b16 %v365, %v364
        %v417 = vpack.c.b16 %v367, %v366
        %v418 = vpack.c.b16 %v369, %v368
        %v419 = vpack.c.b16 %v371, %v370
        %v420 = vpack.c.b16 %v373, %v372
        %v421 = vpack.c.b16 %v375, %v374
        %v422 = vpack.c.b16 %v377, %v376
        %v423 = vpack.c.b16 %v379, %v378
        %v424 = vpack.c.b16 %v381, %v380
        %v425 = vpack.c.b16 %v383, %v382
        %v426 = vpack.c.b16 %v385, %v384
        %v427 = vpack.c.b16 %v387, %v386
        %v428 = vpack.c.b16 %v389, %v388
        %v429 = vpack.c.b16 %v391, %v390
        %v430 = vpack.c.b16 %v393, %v392
        %v431 = vpack.c.b16 %v395, %v394
        %v432 = vpack.c.b16 %v397, %v396
        %v433 = vpack.c.b16 %v399, %v398
        %v434 = vpack.c.b16 %v401, %v400
        %v435 = vpack.c.b16 %v403, %v402
        %v500 = vunpack.c.l.b16 %v244
        %v501 = vunpack.c.h.b16 %v244
        %v502 = vunpack.c.l.b16 %v245
        %v503 = vunpack.c.h.b16 %v245
        %v504 = vunpack.c.l.b16 %v246
        %v505 = vunpack.c.h.b16 %v246
        %v506 = vunpack.c.l.b16 %v247
        %v507 = vunpack.c.h.b16 %v247
        %v508 = vunpack.c.l.b16 %v248
        %v509 = vunpack.c.h.b16 %v248
        %v510 = vunpack.c.l.b16 %v249
        %v511 = vunpack.c.h.b16 %v249
        %v512 = vunpack.c.l.b16 %v250
        %v513 = vunpack.c.h.b16 %v250
        %v514 = vunpack.c.l.b16 %v251
        %v515 = vunpack.c.h.b16 %v251
        %v516 = vunpack.c.l.b16 %v252
        %v517 = vunpack.c.h.b16 %v252
        %v518 = vunpack.c.l.b16 %v253
        %v519 = vunpack.c.h.b16 %v253
        %v520 = vunpack.c.l.b16 %v254
        %v521 = vunpack.c.h.b16 %v254
        %v522 = vunpack.c.l.b16 %v255
        %v523 = vunpack.c.h.b16 %v255
        %v524 = vunpack.c.l.b16 %v256
        %v525 = vunpack.c.h.b16 %v256
        %v526 = vunpack.c.l.b16 %v257
        %v527 = vunpack.c.h.b16 %v257
        %v528 = vunpack.c.l.b16 %v258
        %v529 = vunpack.c.h.b16 %v258
        %v530 = vunpack.c.l.b16 %v259
        %v531 = vunpack.c.h.b16 %v259
        %v532 = vunpack.c.l.b16 %v260
        %v533 = vunpack.c.h.b16 %v260
        %v534 = vunpack.c.l.b16 %v261
        %v535 = vunpack.c.h.b16 %v261
        %v536 = vunpack.c.l.b16 %v262
        %v537 = vunpack.c.h.b16 %v262
        %v538 = vunpack.c.l.b16 %v263
        %v539 = vunpack.c.h.b16 %v263
        %v540 = vunpack.c.l.b16 %v264
        %v541 = vunpack.c.h.b16 %v264
        %v542 = vunpack.c.l.b16 %v265
        %v543 = vunpack.c.h.b16 %v265
        %v544 = vunpack.c.l.b16 %v266
        %v545 = vunpack.c.h.b16 %v266
        %v546 = vunpack.c.l.b16 %v267
        %v547 = vunpack.c.h.b16 %v267
        %v548 = vunpack.c.l.b16 %v268
        %v549 = vunpack.c.h.b16 %v268
        %v550 = vunpack.c.l.b16 %v269
        %v551 = vunpack.c.h.b16 %v269
        %v552 = vunpack.c.l.b16 %v270
        %v553 = vunpack.c.h.b16 %v270
        %v554 = vunpack.c.l.b16 %v271
        %v555 = vunpack.c.h.b16 %v271
        %v556 = vunpack.c.l.b16 %v272
        %v557 = vunpack.c.h.b16 %v272
        %v558 = vunpack.c.l.b16 %v273
        %v559 = vunpack.c.h.b16 %v273
        %v560 = vunpack.c.l.b16 %v274
        %v561 = vunpack.c.h.b16 %v274
        %v562 = vunpack.c.l.b16 %v275
        %v563 = vunpack.c.h.b16 %v275
        %v564 = vpack.c.b16 %v504, %v500
        %v565 = vpack.c.b16 %v505, %v501
        %v566 = vpack.c.b16 %v506, %v502
        %v567 = vpack.c.b16 %v507, %v503
        %v568 = vpack.c.b16 %v512, %v508
        %v569 = vpack.c.b16 %v513, %v509
        %v570 = vpack.c.b16 %v514, %v510
        %v571 = vpack.c.b16 %v515, %v511
        %v572 = vpack.c.b16 %v520, %v516
        %v573 = vpack.c.b16 %v521, %v517
        %v574 = vpack.c.b16 %v522, %v518
        %v575 = vpack.c.b16 %v523, %v519
        %v576 = vpack.c.b16 %v528, %v524
        %v577 = vpack.c.b16 %v529, %v525
        %v578 = vpack.c.b16 %v530, %v526
        %v579 = vpack.c.b16 %v531, %v527
        %v580 = vpack.c.b16 %v536, %v532
        %v581 = vpack.c.b16 %v537, %v533
        %v582 = vpack.c.b16 %v538, %v534
        %v583 = vpack.c.b16 %v539, %v535
        %v584 = vpack.c.b16 %v544, %v540
        %v585 = vpack.c.b16 %v545, %v541
        %v586 = vpack.c.b16 %v546, %v542
        %v587 = vpack.c.b16 %v547, %v543
        %v588 = vpack.c.b16 %v552, %v548
        %v589 = vpack.c.b16 %v553, %v549
        %v590 = vpack.c.b16 %v554, %v550
        %v591 = vpack.c.b16 %v555, %v551
        %v592 = vpack.c.b16 %v560, %v556
        %v593 = vpack.c.b16 %v561, %v557
        %v594 = vpack.c.b16 %v562, %v558
        %v595 = vpack.c.b16 %v563, %v559
        %628 = vmatprep.subr.bf16.mxu0 %v565
        %629 = vmatpush1.bf16.msra.mxu0 %v564
        %630 = vmatprep.subr.bf16.mxu0 %v569
        %631 = vmatpush1.bf16.msra.mxu0 %v568
        %632 = vmatprep.subr.bf16.mxu0 %v573
        %633 = vmatpush1.bf16.msra.mxu0 %v572
        %634 = vmatprep.subr.bf16.mxu0 %v577
        %635 = vmatpush1.bf16.msra.mxu0 %v576
        %636 = vmatprep.subr.bf16.mxu0 %v581
        %637 = vmatpush1.bf16.msra.mxu0 %v580
        %638 = vmatprep.subr.bf16.mxu0 %v585
        %639 = vmatpush1.bf16.msra.mxu0 %v584
        %640 = vmatprep.subr.bf16.mxu0 %v589
        %641 = vmatpush1.bf16.msra.mxu0 %v588
        %642 = vmatprep.subr.bf16.mxu0 %v593
        %643 = vmatpush1.bf16.msra.mxu0 %v592
        %644 = vmatprep.subr.bf16.mxu0 0
        %645 = vmatpush1.bf16.msra.mxu0 0
        %646 = vmatprep.subr.bf16.mxu0 0
        %647 = vmatpush1.bf16.msra.mxu0 0
        %648 = vmatprep.subr.bf16.mxu0 0
        %649 = vmatpush1.bf16.msra.mxu0 0
        %650 = vmatprep.subr.bf16.mxu0 0
        %651 = vmatpush1.bf16.msra.mxu0 0
        %652 = vmatprep.subr.bf16.mxu0 0
        %653 = vmatpush1.bf16.msra.mxu0 0
        %654 = vmatprep.subr.bf16.mxu0 0
        %655 = vmatpush1.bf16.msra.mxu0 0
        %656 = vmatprep.subr.bf16.mxu0 0
        %657 = vmatpush1.bf16.msra.mxu0 0
        %658 = vmatprep.subr.bf16.mxu0 0
        %659 = vmatpush1.bf16.msra.mxu0 0
        %660 = vmatprep.mubr.bf16.mxu0 0
        %661 = vmatmul.mubr.bf16.gmra.mrb[0].mxu0 %v404
        %v662 = vpop.f32.mrb[0].mxu0
        %v663 = vadd.f32 0.0, %v662
        %v664 = vpop.f32.mrb[0].mxu0
        %v665 = vadd.f32 0.0, %v664
        %v666 = vpop.f32.mrb[0].mxu0
        %v667 = vadd.f32 0.0, %v666
        %v668 = vpop.f32.mrb[0].mxu0
        %v669 = vadd.f32 0.0, %v668
        %670 = vmatprep.mubr.bf16.mxu0 0
        %671 = vmatmul.mubr.bf16.gmra.mrb[0].mxu0 %v405
        %v672 = vpop.f32.mrb[0].mxu0
        %v673 = vadd.f32 0.0, %v672
        %v674 = vpop.f32.mrb[0].mxu0
        %v675 = vadd.f32 0.0, %v674
        %v676 = vpop.f32.mrb[0].mxu0
        %v677 = vadd.f32 0.0, %v676
        %v678 = vpop.f32.mrb[0].mxu0
        %v679 = vadd.f32 0.0, %v678
        %680 = vmatprep.mubr.bf16.mxu0 0
        %681 = vmatmul.mubr.bf16.gmra.mrb[0].mxu0 %v406
        %v682 = vpop.f32.mrb[0].mxu0
        %v683 = vadd.f32 0.0, %v682
        %v684 = vpop.f32.mrb[0].mxu0
        %v685 = vadd.f32 0.0, %v684
        %v686 = vpop.f32.mrb[0].mxu0
        %v687 = vadd.f32 0.0, %v686
        %v688 = vpop.f32.mrb[0].mxu0
        %v689 = vadd.f32 0.0, %v688
        %690 = vmatprep.mubr.bf16.mxu0 0
        %691 = vmatmul.mubr.bf16.gmra.mrb[0].mxu0 %v407
        %v692 = vpop.f32.mrb[0].mxu0
        %v693 = vadd.f32 0.0, %v692
        %v694 = vpop.f32.mrb[0].mxu0
        %v695 = vadd.f32 0.0, %v694
        %v696 = vpop.f32.mrb[0].mxu0
        %v697 = vadd.f32 0.0, %v696
        %v698 = vpop.f32.mrb[0].mxu0
        %v699 = vadd.f32 0.0, %v698
        %700 = vmatprep.mubr.bf16.mxu0 0
        %701 = vmatmul.mubr.bf16.gmra.mrb[0].mxu0 %v408
        %v702 = vpop.f32.mrb[0].mxu0
        %v703 = vadd.f32 0.0, %v702
        %v704 = vpop.f32.mrb[0].mxu0
        %v705 = vadd.f32 0.0, %v704
        %v706 = vpop.f32.mrb[0].mxu0
        %v707 = vadd.f32 0.0, %v706
        %v708 = vpop.f32.mrb[0].mxu0
        %v709 = vadd.f32 0.0, %v708
        %710 = vmatprep.mubr.bf16.mxu0 0
        %711 = vmatmul.mubr.bf16.gmra.mrb[0].mxu0 %v409
        %v712 = vpop.f32.mrb[0].mxu0
        %v713 = vadd.f32 0.0, %v712
        %v714 = vpop.f32.mrb[0].mxu0
        %v715 = vadd.f32 0.0, %v714
        %v716 = vpop.f32.mrb[0].mxu0
        %v717 = vadd.f32 0.0, %v716
        %v718 = vpop.f32.mrb[0].mxu0
        %v719 = vadd.f32 0.0, %v718
        %720 = vmatprep.mubr.bf16.mxu0 0
        %721 = vmatmul.mubr.bf16.gmra.mrb[0].mxu0 %v410
        %v722 = vpop.f32.mrb[0].mxu0
        %v723 = vadd.f32 0.0, %v722
        %v724 = vpop.f32.mrb[0].mxu0
        %v725 = vadd.f32 0.0, %v724
        %v726 = vpop.f32.mrb[0].mxu0
        %v727 = vadd.f32 0.0, %v726
        %v728 = vpop.f32.mrb[0].mxu0
        %v729 = vadd.f32 0.0, %v728
        %730 = vmatprep.mubr.bf16.mxu0 0
        %731 = vmatmul.mubr.bf16.gmra.mrb[0].mxu0 %v411
        %v732 = vpop.f32.mrb[0].mxu0
        %v733 = vadd.f32 0.0, %v732
        %v734 = vpop.f32.mrb[0].mxu0
        %v735 = vadd.f32 0.0, %v734
        %v736 = vpop.f32.mrb[0].mxu0
        %v737 = vadd.f32 0.0, %v736
        %v738 = vpop.f32.mrb[0].mxu0
        %v739 = vadd.f32 0.0, %v738
        %740 = vmatprep.mubr.bf16.mxu0 0
        %741 = vmatmul.mubr.bf16.gmra.mrb[0].mxu0 %v412
        %v742 = vpop.f32.mrb[0].mxu0
        %v743 = vadd.f32 0.0, %v742
        %v744 = vpop.f32.mrb[0].mxu0
        %v745 = vadd.f32 0.0, %v744
        %v746 = vpop.f32.mrb[0].mxu0
        %v747 = vadd.f32 0.0, %v746
        %v748 = vpop.f32.mrb[0].mxu0
        %v749 = vadd.f32 0.0, %v748
        %750 = vmatprep.mubr.bf16.mxu0 0
        %751 = vmatmul.mubr.bf16.gmra.mrb[0].mxu0 %v413
        %v752 = vpop.f32.mrb[0].mxu0
        %v753 = vadd.f32 0.0, %v752
        %v754 = vpop.f32.mrb[0].mxu0
        %v755 = vadd.f32 0.0, %v754
        %v756 = vpop.f32.mrb[0].mxu0
        %v757 = vadd.f32 0.0, %v756
        %v758 = vpop.f32.mrb[0].mxu0
        %v759 = vadd.f32 0.0, %v758
        %760 = vmatprep.mubr.bf16.mxu0 0
        %761 = vmatmul.mubr.bf16.gmra.mrb[0].mxu0 %v414
        %v762 = vpop.f32.mrb[0].mxu0
        %v763 = vadd.f32 0.0, %v762
        %v764 = vpop.f32.mrb[0].mxu0
        %v765 = vadd.f32 0.0, %v764
        %v766 = vpop.f32.mrb[0].mxu0
        %v767 = vadd.f32 0.0, %v766
        %v768 = vpop.f32.mrb[0].mxu0
        %v769 = vadd.f32 0.0, %v768
        %770 = vmatprep.mubr.bf16.mxu0 0
        %771 = vmatmul.mubr.bf16.gmra.mrb[0].mxu0 %v415
        %v772 = vpop.f32.mrb[0].mxu0
        %v773 = vadd.f32 0.0, %v772
        %v774 = vpop.f32.mrb[0].mxu0
        %v775 = vadd.f32 0.0, %v774
        %v776 = vpop.f32.mrb[0].mxu0
        %v777 = vadd.f32 0.0, %v776
        %v778 = vpop.f32.mrb[0].mxu0
        %v779 = vadd.f32 0.0, %v778
        %780 = vmatprep.mubr.bf16.mxu0 0
        %781 = vmatmul.mubr.bf16.gmra.mrb[0].mxu0 %v416
        %v782 = vpop.f32.mrb[0].mxu0
        %v783 = vadd.f32 0.0, %v782
        %v784 = vpop.f32.mrb[0].mxu0
        %v785 = vadd.f32 0.0, %v784
        %v786 = vpop.f32.mrb[0].mxu0
        %v787 = vadd.f32 0.0, %v786
        %v788 = vpop.f32.mrb[0].mxu0
        %v789 = vadd.f32 0.0, %v788
        %790 = vmatprep.mubr.bf16.mxu0 0
        %791 = vmatmul.mubr.bf16.gmra.mrb[0].mxu0 %v417
        %v792 = vpop.f32.mrb[0].mxu0
        %v793 = vadd.f32 0.0, %v792
        %v794 = vpop.f32.mrb[0].mxu0
        %v795 = vadd.f32 0.0, %v794
        %v796 = vpop.f32.mrb[0].mxu0
        %v797 = vadd.f32 0.0, %v796
        %v798 = vpop.f32.mrb[0].mxu0
        %v799 = vadd.f32 0.0, %v798
        %800 = vmatprep.mubr.bf16.mxu0 0
        %801 = vmatmul.mubr.bf16.gmra.mrb[0].mxu0 %v418
        %v802 = vpop.f32.mrb[0].mxu0
        %v803 = vadd.f32 0.0, %v802
        %v804 = vpop.f32.mrb[0].mxu0
        %v805 = vadd.f32 0.0, %v804
        %v806 = vpop.f32.mrb[0].mxu0
        %v807 = vadd.f32 0.0, %v806
        %v808 = vpop.f32.mrb[0].mxu0
        %v809 = vadd.f32 0.0, %v808
        %810 = vmatprep.mubr.bf16.mxu0 0
        %811 = vmatmul.mubr.bf16.gmra.mrb[0].mxu0 %v419
        %v812 = vpop.f32.mrb[0].mxu0
        %v813 = vadd.f32 0.0, %v812
        %v814 = vpop.f32.mrb[0].mxu0
        %v815 = vadd.f32 0.0, %v814
        %v816 = vpop.f32.mrb[0].mxu0
        %v817 = vadd.f32 0.0, %v816
        %v818 = vpop.f32.mrb[0].mxu0
        %v819 = vadd.f32 0.0, %v818
        %820 = vmatprep.mubr.bf16.mxu0 0
        %821 = vmatmul.mubr.bf16.gmra.mrb[0].mxu0 %v420
        %v822 = vpop.f32.mrb[0].mxu0
        %v823 = vadd.f32 0.0, %v822
        %v824 = vpop.f32.mrb[0].mxu0
        %v825 = vadd.f32 0.0, %v824
        %v826 = vpop.f32.mrb[0].mxu0
        %v827 = vadd.f32 0.0, %v826
        %v828 = vpop.f32.mrb[0].mxu0
        %v829 = vadd.f32 0.0, %v828
        %830 = vmatprep.mubr.bf16.mxu0 0
        %831 = vmatmul.mubr.bf16.gmra.mrb[0].mxu0 %v421
        %v832 = vpop.f32.mrb[0].mxu0
        %v833 = vadd.f32 0.0, %v832
        %v834 = vpop.f32.mrb[0].mxu0
        %v835 = vadd.f32 0.0, %v834
        %v836 = vpop.f32.mrb[0].mxu0
        %v837 = vadd.f32 0.0, %v836
        %v838 = vpop.f32.mrb[0].mxu0
        %v839 = vadd.f32 0.0, %v838
        %840 = vmatprep.mubr.bf16.mxu0 0
        %841 = vmatmul.mubr.bf16.gmra.mrb[0].mxu0 %v422
        %v842 = vpop.f32.mrb[0].mxu0
        %v843 = vadd.f32 0.0, %v842
        %v844 = vpop.f32.mrb[0].mxu0
        %v845 = vadd.f32 0.0, %v844
        %v846 = vpop.f32.mrb[0].mxu0
        %v847 = vadd.f32 0.0, %v846
        %v848 = vpop.f32.mrb[0].mxu0
        %v849 = vadd.f32 0.0, %v848
        %850 = vmatprep.mubr.bf16.mxu0 0
        %851 = vmatmul.mubr.bf16.gmra.mrb[0].mxu0 %v423
        %v852 = vpop.f32.mrb[0].mxu0
        %v853 = vadd.f32 0.0, %v852
        %v854 = vpop.f32.mrb[0].mxu0
        %v855 = vadd.f32 0.0, %v854
        %v856 = vpop.f32.mrb[0].mxu0
        %v857 = vadd.f32 0.0, %v856
        %v858 = vpop.f32.mrb[0].mxu0
        %v859 = vadd.f32 0.0, %v858
        %860 = vmatprep.mubr.bf16.mxu0 0
        %861 = vmatmul.mubr.bf16.gmra.mrb[0].mxu0 %v424
        %v862 = vpop.f32.mrb[0].mxu0
        %v863 = vadd.f32 0.0, %v862
        %v864 = vpop.f32.mrb[0].mxu0
        %v865 = vadd.f32 0.0, %v864
        %v866 = vpop.f32.mrb[0].mxu0
        %v867 = vadd.f32 0.0, %v866
        %v868 = vpop.f32.mrb[0].mxu0
        %v869 = vadd.f32 0.0, %v868
        %870 = vmatprep.mubr.bf16.mxu0 0
        %871 = vmatmul.mubr.bf16.gmra.mrb[0].mxu0 %v425
        %v872 = vpop.f32.mrb[0].mxu0
        %v873 = vadd.f32 0.0, %v872
        %v874 = vpop.f32.mrb[0].mxu0
        %v875 = vadd.f32 0.0, %v874
        %v876 = vpop.f32.mrb[0].mxu0
        %v877 = vadd.f32 0.0, %v876
        %v878 = vpop.f32.mrb[0].mxu0
        %v879 = vadd.f32 0.0, %v878
        %880 = vmatprep.mubr.bf16.mxu0 0
        %881 = vmatmul.mubr.bf16.gmra.mrb[0].mxu0 %v426
        %v882 = vpop.f32.mrb[0].mxu0
        %v883 = vadd.f32 0.0, %v882
        %v884 = vpop.f32.mrb[0].mxu0
        %v885 = vadd.f32 0.0, %v884
        %v886 = vpop.f32.mrb[0].mxu0
        %v887 = vadd.f32 0.0, %v886
        %v888 = vpop.f32.mrb[0].mxu0
        %v889 = vadd.f32 0.0, %v888
        %890 = vmatprep.mubr.bf16.mxu0 0
        %891 = vmatmul.mubr.bf16.gmra.mrb[0].mxu0 %v427
        %v892 = vpop.f32.mrb[0].mxu0
        %v893 = vadd.f32 0.0, %v892
        %v894 = vpop.f32.mrb[0].mxu0
        %v895 = vadd.f32 0.0, %v894
        %v896 = vpop.f32.mrb[0].mxu0
        %v897 = vadd.f32 0.0, %v896
        %v898 = vpop.f32.mrb[0].mxu0
        %v899 = vadd.f32 0.0, %v898
        %900 = vmatprep.mubr.bf16.mxu0 0
        %901 = vmatmul.mubr.bf16.gmra.mrb[0].mxu0 %v428
        %v902 = vpop.f32.mrb[0].mxu0
        %v903 = vadd.f32 0.0, %v902
        %v904 = vpop.f32.mrb[0].mxu0
        %v905 = vadd.f32 0.0, %v904
        %v906 = vpop.f32.mrb[0].mxu0
        %v907 = vadd.f32 0.0, %v906
        %v908 = vpop.f32.mrb[0].mxu0
        %v909 = vadd.f32 0.0, %v908
        %910 = vmatprep.mubr.bf16.mxu0 0
        %911 = vmatmul.mubr.bf16.gmra.mrb[0].mxu0 %v429
        %v912 = vpop.f32.mrb[0].mxu0
        %v913 = vadd.f32 0.0, %v912
        %v914 = vpop.f32.mrb[0].mxu0
        %v915 = vadd.f32 0.0, %v914
        %v916 = vpop.f32.mrb[0].mxu0
        %v917 = vadd.f32 0.0, %v916
        %v918 = vpop.f32.mrb[0].mxu0
        %v919 = vadd.f32 0.0, %v918
        %920 = vmatprep.mubr.bf16.mxu0 0
        %921 = vmatmul.mubr.bf16.gmra.mrb[0].mxu0 %v430
        %v922 = vpop.f32.mrb[0].mxu0
        %v923 = vadd.f32 0.0, %v922
        %v924 = vpop.f32.mrb[0].mxu0
        %v925 = vadd.f32 0.0, %v924
        %v926 = vpop.f32.mrb[0].mxu0
        %v927 = vadd.f32 0.0, %v926
        %v928 = vpop.f32.mrb[0].mxu0
        %v929 = vadd.f32 0.0, %v928
        %930 = vmatprep.mubr.bf16.mxu0 0
        %931 = vmatmul.mubr.bf16.gmra.mrb[0].mxu0 %v431
        %v932 = vpop.f32.mrb[0].mxu0
        %v933 = vadd.f32 0.0, %v932
        %v934 = vpop.f32.mrb[0].mxu0
        %v935 = vadd.f32 0.0, %v934
        %v936 = vpop.f32.mrb[0].mxu0
        %v937 = vadd.f32 0.0, %v936
        %v938 = vpop.f32.mrb[0].mxu0
        %v939 = vadd.f32 0.0, %v938
        %940 = vmatprep.mubr.bf16.mxu0 0
        %941 = vmatmul.mubr.bf16.gmra.mrb[0].mxu0 %v432
        %v942 = vpop.f32.mrb[0].mxu0
        %v943 = vadd.f32 0.0, %v942
        %v944 = vpop.f32.mrb[0].mxu0
        %v945 = vadd.f32 0.0, %v944
        %v946 = vpop.f32.mrb[0].mxu0
        %v947 = vadd.f32 0.0, %v946
        %v948 = vpop.f32.mrb[0].mxu0
        %v949 = vadd.f32 0.0, %v948
        %950 = vmatprep.mubr.bf16.mxu0 0
        %951 = vmatmul.mubr.bf16.gmra.mrb[0].mxu0 %v433
        %v952 = vpop.f32.mrb[0].mxu0
        %v953 = vadd.f32 0.0, %v952
        %v954 = vpop.f32.mrb[0].mxu0
        %v955 = vadd.f32 0.0, %v954
        %v956 = vpop.f32.mrb[0].mxu0
        %v957 = vadd.f32 0.0, %v956
        %v958 = vpop.f32.mrb[0].mxu0
        %v959 = vadd.f32 0.0, %v958
        %960 = vmatprep.mubr.bf16.mxu0 0
        %961 = vmatmul.mubr.bf16.gmra.mrb[0].mxu0 %v434
        %v962 = vpop.f32.mrb[0].mxu0
        %v963 = vadd.f32 0.0, %v962
        %v964 = vpop.f32.mrb[0].mxu0
        %v965 = vadd.f32 0.0, %v964
        %v966 = vpop.f32.mrb[0].mxu0
        %v967 = vadd.f32 0.0, %v966
        %v968 = vpop.f32.mrb[0].mxu0
        %v969 = vadd.f32 0.0, %v968
        %970 = vmatprep.mubr.bf16.mxu0 0
        %971 = vmatmul.mubr.bf16.gmra.mrb[0].mxu0 %v435
        %v972 = vpop.f32.mrb[0].mxu0
        %v973 = vadd.f32 0.0, %v972
        %v974 = vpop.f32.mrb[0].mxu0
        %v975 = vadd.f32 0.0, %v974
        %v976 = vpop.f32.mrb[0].mxu0
        %v977 = vadd.f32 0.0, %v976
        %v978 = vpop.f32.mrb[0].mxu0
        %v979 = vadd.f32 0.0, %v978
        %980 = vdwg.mxu0
        %981 = vmatprep.subr.bf16.mxu0 %v567
        %982 = vmatpush1.bf16.msra.mxu0 %v566
        %983 = vmatprep.subr.bf16.mxu0 %v571
        %984 = vmatpush1.bf16.msra.mxu0 %v570
        %985 = vmatprep.subr.bf16.mxu0 %v575
        %986 = vmatpush1.bf16.msra.mxu0 %v574
        %987 = vmatprep.subr.bf16.mxu0 %v579
        %988 = vmatpush1.bf16.msra.mxu0 %v578
        %989 = vmatprep.subr.bf16.mxu0 %v583
        %990 = vmatpush1.bf16.msra.mxu0 %v582
        %991 = vmatprep.subr.bf16.mxu0 %v587
        %992 = vmatpush1.bf16.msra.mxu0 %v586
        %993 = vmatprep.subr.bf16.mxu0 %v591
        %994 = vmatpush1.bf16.msra.mxu0 %v590
        %995 = vmatprep.subr.bf16.mxu0 %v595
        %996 = vmatpush1.bf16.msra.mxu0 %v594
        %997 = vmatprep.subr.bf16.mxu0 0
        %998 = vmatpush1.bf16.msra.mxu0 0
        %999 = vmatprep.subr.bf16.mxu0 0
        %1000 = vmatpush1.bf16.msra.mxu0 0
        %1001 = vmatprep.subr.bf16.mxu0 0
        %1002 = vmatpush1.bf16.msra.mxu0 0
        %1003 = vmatprep.subr.bf16.mxu0 0
        %1004 = vmatpush1.bf16.msra.mxu0 0
        %1005 = vmatprep.subr.bf16.mxu0 0
        %1006 = vmatpush1.bf16.msra.mxu0 0
        %1007 = vmatprep.subr.bf16.mxu0 0
        %1008 = vmatpush1.bf16.msra.mxu0 0
        %1009 = vmatprep.subr.bf16.mxu0 0
        %1010 = vmatpush1.bf16.msra.mxu0 0
        %1011 = vmatprep.subr.bf16.mxu0 0
        %1012 = vmatpush1.bf16.msra.mxu0 0
        %1013 = vmatprep.mubr.bf16.mxu0 0
        %1014 = vmatmul.mubr.bf16.gmra.mrb[0].mxu0 %v404
        %v1015 = vpop.f32.mrb[0].mxu0
        %v1016 = vadd.f32 0.0, %v1015
        %v1017 = vpop.f32.mrb[0].mxu0
        %v1018 = vadd.f32 0.0, %v1017
        %v1019 = vpop.f32.mrb[0].mxu0
        %v1020 = vadd.f32 0.0, %v1019
        %v1021 = vpop.f32.mrb[0].mxu0
        %v1022 = vadd.f32 0.0, %v1021
        %1023 = vmatprep.mubr.bf16.mxu0 0
        %1024 = vmatmul.mubr.bf16.gmra.mrb[0].mxu0 %v405
        %v1025 = vpop.f32.mrb[0].mxu0
        %v1026 = vadd.f32 0.0, %v1025
        %v1027 = vpop.f32.mrb[0].mxu0
        %v1028 = vadd.f32 0.0, %v1027
        %v1029 = vpop.f32.mrb[0].mxu0
        %v1030 = vadd.f32 0.0, %v1029
        %v1031 = vpop.f32.mrb[0].mxu0
        %v1032 = vadd.f32 0.0, %v1031
        %1033 = vmatprep.mubr.bf16.mxu0 0
        %1034 = vmatmul.mubr.bf16.gmra.mrb[0].mxu0 %v406
        %v1035 = vpop.f32.mrb[0].mxu0
        %v1036 = vadd.f32 0.0, %v1035
        %v1037 = vpop.f32.mrb[0].mxu0
        %v1038 = vadd.f32 0.0, %v1037
        %v1039 = vpop.f32.mrb[0].mxu0
        %v1040 = vadd.f32 0.0, %v1039
        %v1041 = vpop.f32.mrb[0].mxu0
        %v1042 = vadd.f32 0.0, %v1041
        %1043 = vmatprep.mubr.bf16.mxu0 0
        %1044 = vmatmul.mubr.bf16.gmra.mrb[0].mxu0 %v407
        %v1045 = vpop.f32.mrb[0].mxu0
        %v1046 = vadd.f32 0.0, %v1045
        %v1047 = vpop.f32.mrb[0].mxu0
        %v1048 = vadd.f32 0.0, %v1047
        %v1049 = vpop.f32.mrb[0].mxu0
        %v1050 = vadd.f32 0.0, %v1049
        %v1051 = vpop.f32.mrb[0].mxu0
        %v1052 = vadd.f32 0.0, %v1051
        %1053 = vmatprep.mubr.bf16.mxu0 0
        %1054 = vmatmul.mubr.bf16.gmra.mrb[0].mxu0 %v408
        %v1055 = vpop.f32.mrb[0].mxu0
        %v1056 = vadd.f32 0.0, %v1055
        %v1057 = vpop.f32.mrb[0].mxu0
        %v1058 = vadd.f32 0.0, %v1057
        %v1059 = vpop.f32.mrb[0].mxu0
        %v1060 = vadd.f32 0.0, %v1059
        %v1061 = vpop.f32.mrb[0].mxu0
        %v1062 = vadd.f32 0.0, %v1061
        %1063 = vmatprep.mubr.bf16.mxu0 0
        %1064 = vmatmul.mubr.bf16.gmra.mrb[0].mxu0 %v409
        %v1065 = vpop.f32.mrb[0].mxu0
        %v1066 = vadd.f32 0.0, %v1065
        %v1067 = vpop.f32.mrb[0].mxu0
        %v1068 = vadd.f32 0.0, %v1067
        %v1069 = vpop.f32.mrb[0].mxu0
        %v1070 = vadd.f32 0.0, %v1069
        %v1071 = vpop.f32.mrb[0].mxu0
        %v1072 = vadd.f32 0.0, %v1071
        %1073 = vmatprep.mubr.bf16.mxu0 0
        %1074 = vmatmul.mubr.bf16.gmra.mrb[0].mxu0 %v410
        %v1075 = vpop.f32.mrb[0].mxu0
        %v1076 = vadd.f32 0.0, %v1075
        %v1077 = vpop.f32.mrb[0].mxu0
        %v1078 = vadd.f32 0.0, %v1077
        %v1079 = vpop.f32.mrb[0].mxu0
        %v1080 = vadd.f32 0.0, %v1079
        %v1081 = vpop.f32.mrb[0].mxu0
        %v1082 = vadd.f32 0.0, %v1081
        %1083 = vmatprep.mubr.bf16.mxu0 0
        %1084 = vmatmul.mubr.bf16.gmra.mrb[0].mxu0 %v411
        %v1085 = vpop.f32.mrb[0].mxu0
        %v1086 = vadd.f32 0.0, %v1085
        %v1087 = vpop.f32.mrb[0].mxu0
        %v1088 = vadd.f32 0.0, %v1087
        %v1089 = vpop.f32.mrb[0].mxu0
        %v1090 = vadd.f32 0.0, %v1089
        %v1091 = vpop.f32.mrb[0].mxu0
        %v1092 = vadd.f32 0.0, %v1091
        %1093 = vmatprep.mubr.bf16.mxu0 0
        %1094 = vmatmul.mubr.bf16.gmra.mrb[0].mxu0 %v412
        %v1095 = vpop.f32.mrb[0].mxu0
        %v1096 = vadd.f32 0.0, %v1095
        %v1097 = vpop.f32.mrb[0].mxu0
        %v1098 = vadd.f32 0.0, %v1097
        %v1099 = vpop.f32.mrb[0].mxu0
        %v1100 = vadd.f32 0.0, %v1099
        %v1101 = vpop.f32.mrb[0].mxu0
        %v1102 = vadd.f32 0.0, %v1101
        %1103 = vmatprep.mubr.bf16.mxu0 0
        %1104 = vmatmul.mubr.bf16.gmra.mrb[0].mxu0 %v413
        %v1105 = vpop.f32.mrb[0].mxu0
        %v1106 = vadd.f32 0.0, %v1105
        %v1107 = vpop.f32.mrb[0].mxu0
        %v1108 = vadd.f32 0.0, %v1107
        %v1109 = vpop.f32.mrb[0].mxu0
        %v1110 = vadd.f32 0.0, %v1109
        %v1111 = vpop.f32.mrb[0].mxu0
        %v1112 = vadd.f32 0.0, %v1111
        %1113 = vmatprep.mubr.bf16.mxu0 0
        %1114 = vmatmul.mubr.bf16.gmra.mrb[0].mxu0 %v414
        %v1115 = vpop.f32.mrb[0].mxu0
        %v1116 = vadd.f32 0.0, %v1115
        %v1117 = vpop.f32.mrb[0].mxu0
        %v1118 = vadd.f32 0.0, %v1117
        %v1119 = vpop.f32.mrb[0].mxu0
        %v1120 = vadd.f32 0.0, %v1119
        %v1121 = vpop.f32.mrb[0].mxu0
        %v1122 = vadd.f32 0.0, %v1121
        %1123 = vmatprep.mubr.bf16.mxu0 0
        %1124 = vmatmul.mubr.bf16.gmra.mrb[0].mxu0 %v415
        %v1125 = vpop.f32.mrb[0].mxu0
        %v1126 = vadd.f32 0.0, %v1125
        %v1127 = vpop.f32.mrb[0].mxu0
        %v1128 = vadd.f32 0.0, %v1127
        %v1129 = vpop.f32.mrb[0].mxu0
        %v1130 = vadd.f32 0.0, %v1129
        %v1131 = vpop.f32.mrb[0].mxu0
        %v1132 = vadd.f32 0.0, %v1131
        %1133 = vmatprep.mubr.bf16.mxu0 0
        %1134 = vmatmul.mubr.bf16.gmra.mrb[0].mxu0 %v416
        %v1135 = vpop.f32.mrb[0].mxu0
        %v1136 = vadd.f32 0.0, %v1135
        %v1137 = vpop.f32.mrb[0].mxu0
        %v1138 = vadd.f32 0.0, %v1137
        %v1139 = vpop.f32.mrb[0].mxu0
        %v1140 = vadd.f32 0.0, %v1139
        %v1141 = vpop.f32.mrb[0].mxu0
        %v1142 = vadd.f32 0.0, %v1141
        %1143 = vmatprep.mubr.bf16.mxu0 0
        %1144 = vmatmul.mubr.bf16.gmra.mrb[0].mxu0 %v417
        %v1145 = vpop.f32.mrb[0].mxu0
        %v1146 = vadd.f32 0.0, %v1145
        %v1147 = vpop.f32.mrb[0].mxu0
        %v1148 = vadd.f32 0.0, %v1147
        %v1149 = vpop.f32.mrb[0].mxu0
        %v1150 = vadd.f32 0.0, %v1149
        %v1151 = vpop.f32.mrb[0].mxu0
        %v1152 = vadd.f32 0.0, %v1151
        %1153 = vmatprep.mubr.bf16.mxu0 0
        %1154 = vmatmul.mubr.bf16.gmra.mrb[0].mxu0 %v418
        %v1155 = vpop.f32.mrb[0].mxu0
        %v1156 = vadd.f32 0.0, %v1155
        %v1157 = vpop.f32.mrb[0].mxu0
        %v1158 = vadd.f32 0.0, %v1157
        %v1159 = vpop.f32.mrb[0].mxu0
        %v1160 = vadd.f32 0.0, %v1159
        %v1161 = vpop.f32.mrb[0].mxu0
        %v1162 = vadd.f32 0.0, %v1161
        %1163 = vmatprep.mubr.bf16.mxu0 0
        %1164 = vmatmul.mubr.bf16.gmra.mrb[0].mxu0 %v419
        %v1165 = vpop.f32.mrb[0].mxu0
        %v1166 = vadd.f32 0.0, %v1165
        %v1167 = vpop.f32.mrb[0].mxu0
        %v1168 = vadd.f32 0.0, %v1167
        %v1169 = vpop.f32.mrb[0].mxu0
        %v1170 = vadd.f32 0.0, %v1169
        %v1171 = vpop.f32.mrb[0].mxu0
        %v1172 = vadd.f32 0.0, %v1171
        %1173 = vmatprep.mubr.bf16.mxu0 0
        %1174 = vmatmul.mubr.bf16.gmra.mrb[0].mxu0 %v420
        %v1175 = vpop.f32.mrb[0].mxu0
        %v1176 = vadd.f32 0.0, %v1175
        %v1177 = vpop.f32.mrb[0].mxu0
        %v1178 = vadd.f32 0.0, %v1177
        %v1179 = vpop.f32.mrb[0].mxu0
        %v1180 = vadd.f32 0.0, %v1179
        %v1181 = vpop.f32.mrb[0].mxu0
        %v1182 = vadd.f32 0.0, %v1181
        %1183 = vmatprep.mubr.bf16.mxu0 0
        %1184 = vmatmul.mubr.bf16.gmra.mrb[0].mxu0 %v421
        %v1185 = vpop.f32.mrb[0].mxu0
        %v1186 = vadd.f32 0.0, %v1185
        %v1187 = vpop.f32.mrb[0].mxu0
        %v1188 = vadd.f32 0.0, %v1187
        %v1189 = vpop.f32.mrb[0].mxu0
        %v1190 = vadd.f32 0.0, %v1189
        %v1191 = vpop.f32.mrb[0].mxu0
        %v1192 = vadd.f32 0.0, %v1191
        %1193 = vmatprep.mubr.bf16.mxu0 0
        %1194 = vmatmul.mubr.bf16.gmra.mrb[0].mxu0 %v422
        %v1195 = vpop.f32.mrb[0].mxu0
        %v1196 = vadd.f32 0.0, %v1195
        %v1197 = vpop.f32.mrb[0].mxu0
        %v1198 = vadd.f32 0.0, %v1197
        %v1199 = vpop.f32.mrb[0].mxu0
        %v1200 = vadd.f32 0.0, %v1199
        %v1201 = vpop.f32.mrb[0].mxu0
        %v1202 = vadd.f32 0.0, %v1201
        %1203 = vmatprep.mubr.bf16.mxu0 0
        %1204 = vmatmul.mubr.bf16.gmra.mrb[0].mxu0 %v423
        %v1205 = vpop.f32.mrb[0].mxu0
        %v1206 = vadd.f32 0.0, %v1205
        %v1207 = vpop.f32.mrb[0].mxu0
        %v1208 = vadd.f32 0.0, %v1207
        %v1209 = vpop.f32.mrb[0].mxu0
        %v1210 = vadd.f32 0.0, %v1209
        %v1211 = vpop.f32.mrb[0].mxu0
        %v1212 = vadd.f32 0.0, %v1211
        %1213 = vmatprep.mubr.bf16.mxu0 0
        %1214 = vmatmul.mubr.bf16.gmra.mrb[0].mxu0 %v424
        %v1215 = vpop.f32.mrb[0].mxu0
        %v1216 = vadd.f32 0.0, %v1215
        %v1217 = vpop.f32.mrb[0].mxu0
        %v1218 = vadd.f32 0.0, %v1217
        %v1219 = vpop.f32.mrb[0].mxu0
        %v1220 = vadd.f32 0.0, %v1219
        %v1221 = vpop.f32.mrb[0].mxu0
        %v1222 = vadd.f32 0.0, %v1221
        %1223 = vmatprep.mubr.bf16.mxu0 0
        %1224 = vmatmul.mubr.bf16.gmra.mrb[0].mxu0 %v425
        %v1225 = vpop.f32.mrb[0].mxu0
        %v1226 = vadd.f32 0.0, %v1225
        %v1227 = vpop.f32.mrb[0].mxu0
        %v1228 = vadd.f32 0.0, %v1227
        %v1229 = vpop.f32.mrb[0].mxu0
        %v1230 = vadd.f32 0.0, %v1229
        %v1231 = vpop.f32.mrb[0].mxu0
        %v1232 = vadd.f32 0.0, %v1231
        %1233 = vmatprep.mubr.bf16.mxu0 0
        %1234 = vmatmul.mubr.bf16.gmra.mrb[0].mxu0 %v426
        %v1235 = vpop.f32.mrb[0].mxu0
        %v1236 = vadd.f32 0.0, %v1235
        %v1237 = vpop.f32.mrb[0].mxu0
        %v1238 = vadd.f32 0.0, %v1237
        %v1239 = vpop.f32.mrb[0].mxu0
        %v1240 = vadd.f32 0.0, %v1239
        %v1241 = vpop.f32.mrb[0].mxu0
        %v1242 = vadd.f32 0.0, %v1241
        %1243 = vmatprep.mubr.bf16.mxu0 0
        %1244 = vmatmul.mubr.bf16.gmra.mrb[0].mxu0 %v427
        %v1245 = vpop.f32.mrb[0].mxu0
        %v1246 = vadd.f32 0.0, %v1245
        %v1247 = vpop.f32.mrb[0].mxu0
        %v1248 = vadd.f32 0.0, %v1247
        %v1249 = vpop.f32.mrb[0].mxu0
        %v1250 = vadd.f32 0.0, %v1249
        %v1251 = vpop.f32.mrb[0].mxu0
        %v1252 = vadd.f32 0.0, %v1251
        %1253 = vmatprep.mubr.bf16.mxu0 0
        %1254 = vmatmul.mubr.bf16.gmra.mrb[0].mxu0 %v428
        %v1255 = vpop.f32.mrb[0].mxu0
        %v1256 = vadd.f32 0.0, %v1255
        %v1257 = vpop.f32.mrb[0].mxu0
        %v1258 = vadd.f32 0.0, %v1257
        %v1259 = vpop.f32.mrb[0].mxu0
        %v1260 = vadd.f32 0.0, %v1259
        %v1261 = vpop.f32.mrb[0].mxu0
        %v1262 = vadd.f32 0.0, %v1261
        %1263 = vmatprep.mubr.bf16.mxu0 0
        %1264 = vmatmul.mubr.bf16.gmra.mrb[0].mxu0 %v429
        %v1265 = vpop.f32.mrb[0].mxu0
        %v1266 = vadd.f32 0.0, %v1265
        %v1267 = vpop.f32.mrb[0].mxu0
        %v1268 = vadd.f32 0.0, %v1267
        %v1269 = vpop.f32.mrb[0].mxu0
        %v1270 = vadd.f32 0.0, %v1269
        %v1271 = vpop.f32.mrb[0].mxu0
        %v1272 = vadd.f32 0.0, %v1271
        %1273 = vmatprep.mubr.bf16.mxu0 0
        %1274 = vmatmul.mubr.bf16.gmra.mrb[0].mxu0 %v430
        %v1275 = vpop.f32.mrb[0].mxu0
        %v1276 = vadd.f32 0.0, %v1275
        %v1277 = vpop.f32.mrb[0].mxu0
        %v1278 = vadd.f32 0.0, %v1277
        %v1279 = vpop.f32.mrb[0].mxu0
        %v1280 = vadd.f32 0.0, %v1279
        %v1281 = vpop.f32.mrb[0].mxu0
        %v1282 = vadd.f32 0.0, %v1281
        %1283 = vmatprep.mubr.bf16.mxu0 0
        %1284 = vmatmul.mubr.bf16.gmra.mrb[0].mxu0 %v431
        %v1285 = vpop.f32.mrb[0].mxu0
        %v1286 = vadd.f32 0.0, %v1285
        %v1287 = vpop.f32.mrb[0].mxu0
        %v1288 = vadd.f32 0.0, %v1287
        %v1289 = vpop.f32.mrb[0].mxu0
        %v1290 = vadd.f32 0.0, %v1289
        %v1291 = vpop.f32.mrb[0].mxu0
        %v1292 = vadd.f32 0.0, %v1291
        %1293 = vmatprep.mubr.bf16.mxu0 0
        %1294 = vmatmul.mubr.bf16.gmra.mrb[0].mxu0 %v432
        %v1295 = vpop.f32.mrb[0].mxu0
        %v1296 = vadd.f32 0.0, %v1295
        %v1297 = vpop.f32.mrb[0].mxu0
        %v1298 = vadd.f32 0.0, %v1297
        %v1299 = vpop.f32.mrb[0].mxu0
        %v1300 = vadd.f32 0.0, %v1299
        %v1301 = vpop.f32.mrb[0].mxu0
        %v1302 = vadd.f32 0.0, %v1301
        %1303 = vmatprep.mubr.bf16.mxu0 0
        %1304 = vmatmul.mubr.bf16.gmra.mrb[0].mxu0 %v433
        %v1305 = vpop.f32.mrb[0].mxu0
        %v1306 = vadd.f32 0.0, %v1305
        %v1307 = vpop.f32.mrb[0].mxu0
        %v1308 = vadd.f32 0.0, %v1307
        %v1309 = vpop.f32.mrb[0].mxu0
        %v1310 = vadd.f32 0.0, %v1309
        %v1311 = vpop.f32.mrb[0].mxu0
        %v1312 = vadd.f32 0.0, %v1311
        %1313 = vmatprep.mubr.bf16.mxu0 0
        %1314 = vmatmul.mubr.bf16.gmra.mrb[0].mxu0 %v434
        %v1315 = vpop.f32.mrb[0].mxu0
        %v1316 = vadd.f32 0.0, %v1315
        %v1317 = vpop.f32.mrb[0].mxu0
        %v1318 = vadd.f32 0.0, %v1317
        %v1319 = vpop.f32.mrb[0].mxu0
        %v1320 = vadd.f32 0.0, %v1319
        %v1321 = vpop.f32.mrb[0].mxu0
        %v1322 = vadd.f32 0.0, %v1321
        %1323 = vmatprep.mubr.bf16.mxu0 0
        %1324 = vmatmul.mubr.bf16.gmra.mrb[0].mxu0 %v435
        %v1325 = vpop.f32.mrb[0].mxu0
        %v1326 = vadd.f32 0.0, %v1325
        %v1327 = vpop.f32.mrb[0].mxu0
        %v1328 = vadd.f32 0.0, %v1327
        %v1329 = vpop.f32.mrb[0].mxu0
        %v1330 = vadd.f32 0.0, %v1329
        %v1331 = vpop.f32.mrb[0].mxu0
        %v1332 = vadd.f32 0.0, %v1331
        %1333 = vdwg.mxu0
        %v1334 = vpack.c.bf16 %v667, %v663
        %v1335 = vpack.c.bf16 %v669, %v665
        %v1336 = vpack.c.bf16 %v1020, %v1016
        %v1337 = vpack.c.bf16 %v1022, %v1018
        %v1338 = vpack.c.bf16 %v677, %v673
        %v1339 = vpack.c.bf16 %v679, %v675
        %v1340 = vpack.c.bf16 %v1030, %v1026
        %v1341 = vpack.c.bf16 %v1032, %v1028
        %v1342 = vpack.c.bf16 %v687, %v683
        %v1343 = vpack.c.bf16 %v689, %v685
        %v1344 = vpack.c.bf16 %v1040, %v1036
        %v1345 = vpack.c.bf16 %v1042, %v1038
        %v1346 = vpack.c.bf16 %v697, %v693
        %v1347 = vpack.c.bf16 %v699, %v695
        %v1348 = vpack.c.bf16 %v1050, %v1046
        %v1349 = vpack.c.bf16 %v1052, %v1048
        %v1350 = vpack.c.bf16 %v707, %v703
        %v1351 = vpack.c.bf16 %v709, %v705
        %v1352 = vpack.c.bf16 %v1060, %v1056
        %v1353 = vpack.c.bf16 %v1062, %v1058
        %v1354 = vpack.c.bf16 %v717, %v713
        %v1355 = vpack.c.bf16 %v719, %v715
        %v1356 = vpack.c.bf16 %v1070, %v1066
        %v1357 = vpack.c.bf16 %v1072, %v1068
        %v1358 = vpack.c.bf16 %v727, %v723
        %v1359 = vpack.c.bf16 %v729, %v725
        %v1360 = vpack.c.bf16 %v1080, %v1076
        %v1361 = vpack.c.bf16 %v1082, %v1078
        %v1362 = vpack.c.bf16 %v737, %v733
        %v1363 = vpack.c.bf16 %v739, %v735
        %v1364 = vpack.c.bf16 %v1090, %v1086
        %v1365 = vpack.c.bf16 %v1092, %v1088
        %v1366 = vpack.c.bf16 %v747, %v743
        %v1367 = vpack.c.bf16 %v749, %v745
        %v1368 = vpack.c.bf16 %v1100, %v1096
        %v1369 = vpack.c.bf16 %v1102, %v1098
        %v1370 = vpack.c.bf16 %v757, %v753
        %v1371 = vpack.c.bf16 %v759, %v755
        %v1372 = vpack.c.bf16 %v1110, %v1106
        %v1373 = vpack.c.bf16 %v1112, %v1108
        %v1374 = vpack.c.bf16 %v767, %v763
        %v1375 = vpack.c.bf16 %v769, %v765
        %v1376 = vpack.c.bf16 %v1120, %v1116
        %v1377 = vpack.c.bf16 %v1122, %v1118
        %v1378 = vpack.c.bf16 %v777, %v773
        %v1379 = vpack.c.bf16 %v779, %v775
        %v1380 = vpack.c.bf16 %v1130, %v1126
        %v1381 = vpack.c.bf16 %v1132, %v1128
        %v1382 = vpack.c.bf16 %v787, %v783
        %v1383 = vpack.c.bf16 %v789, %v785
        %v1384 = vpack.c.bf16 %v1140, %v1136
        %v1385 = vpack.c.bf16 %v1142, %v1138
        %v1386 = vpack.c.bf16 %v797, %v793
        %v1387 = vpack.c.bf16 %v799, %v795
        %v1388 = vpack.c.bf16 %v1150, %v1146
        %v1389 = vpack.c.bf16 %v1152, %v1148
        %v1390 = vpack.c.bf16 %v807, %v803
        %v1391 = vpack.c.bf16 %v809, %v805
        %v1392 = vpack.c.bf16 %v1160, %v1156
        %v1393 = vpack.c.bf16 %v1162, %v1158
        %v1394 = vpack.c.bf16 %v817, %v813
        %v1395 = vpack.c.bf16 %v819, %v815
        %v1396 = vpack.c.bf16 %v1170, %v1166
        %v1397 = vpack.c.bf16 %v1172, %v1168
        %v1398 = vpack.c.bf16 %v827, %v823
        %v1399 = vpack.c.bf16 %v829, %v825
        %v1400 = vpack.c.bf16 %v1180, %v1176
        %v1401 = vpack.c.bf16 %v1182, %v1178
        %v1402 = vpack.c.bf16 %v837, %v833
        %v1403 = vpack.c.bf16 %v839, %v835
        %v1404 = vpack.c.bf16 %v1190, %v1186
        %v1405 = vpack.c.bf16 %v1192, %v1188
        %v1406 = vpack.c.bf16 %v847, %v843
        %v1407 = vpack.c.bf16 %v849, %v845
        %v1408 = vpack.c.bf16 %v1200, %v1196
        %v1409 = vpack.c.bf16 %v1202, %v1198
        %v1410 = vpack.c.bf16 %v857, %v853
        %v1411 = vpack.c.bf16 %v859, %v855
        %v1412 = vpack.c.bf16 %v1210, %v1206
        %v1413 = vpack.c.bf16 %v1212, %v1208
        %v1414 = vpack.c.bf16 %v867, %v863
        %v1415 = vpack.c.bf16 %v869, %v865
        %v1416 = vpack.c.bf16 %v1220, %v1216
        %v1417 = vpack.c.bf16 %v1222, %v1218
        %v1418 = vpack.c.bf16 %v877, %v873
        %v1419 = vpack.c.bf16 %v879, %v875
        %v1420 = vpack.c.bf16 %v1230, %v1226
        %v1421 = vpack.c.bf16 %v1232, %v1228
        %v1422 = vpack.c.bf16 %v887, %v883
        %v1423 = vpack.c.bf16 %v889, %v885
        %v1424 = vpack.c.bf16 %v1240, %v1236
        %v1425 = vpack.c.bf16 %v1242, %v1238
        %v1426 = vpack.c.bf16 %v897, %v893
        %v1427 = vpack.c.bf16 %v899, %v895
        %v1428 = vpack.c.bf16 %v1250, %v1246
        %v1429 = vpack.c.bf16 %v1252, %v1248
        %v1430 = vpack.c.bf16 %v907, %v903
        %v1431 = vpack.c.bf16 %v909, %v905
        %v1432 = vpack.c.bf16 %v1260, %v1256
        %v1433 = vpack.c.bf16 %v1262, %v1258
        %v1434 = vpack.c.bf16 %v917, %v913
        %v1435 = vpack.c.bf16 %v919, %v915
        %v1436 = vpack.c.bf16 %v1270, %v1266
        %v1437 = vpack.c.bf16 %v1272, %v1268
        %v1438 = vpack.c.bf16 %v927, %v923
        %v1439 = vpack.c.bf16 %v929, %v925
        %v1440 = vpack.c.bf16 %v1280, %v1276
        %v1441 = vpack.c.bf16 %v1282, %v1278
        %v1442 = vpack.c.bf16 %v937, %v933
        %v1443 = vpack.c.bf16 %v939, %v935
        %v1444 = vpack.c.bf16 %v1290, %v1286
        %v1445 = vpack.c.bf16 %v1292, %v1288
        %v1446 = vpack.c.bf16 %v947, %v943
        %v1447 = vpack.c.bf16 %v949, %v945
        %v1448 = vpack.c.bf16 %v1300, %v1296
        %v1449 = vpack.c.bf16 %v1302, %v1298
        %v1450 = vpack.c.bf16 %v957, %v953
        %v1451 = vpack.c.bf16 %v959, %v955
        %v1452 = vpack.c.bf16 %v1310, %v1306
        %v1453 = vpack.c.bf16 %v1312, %v1308
        %v1454 = vpack.c.bf16 %v967, %v963
        %v1455 = vpack.c.bf16 %v969, %v965
        %v1456 = vpack.c.bf16 %v1320, %v1316
        %v1457 = vpack.c.bf16 %v1322, %v1318
        %v1458 = vpack.c.bf16 %v977, %v973
        %v1459 = vpack.c.bf16 %v979, %v975
        %v1460 = vpack.c.bf16 %v1330, %v1326
        %v1461 = vpack.c.bf16 %v1332, %v1328
        %v1590 = vunpack.c.l.b16 %v1334
        %v1591 = vunpack.c.l.b16 %v1335
        %v1592 = vunpack.c.l.b16 %v1336
        %v1593 = vunpack.c.l.b16 %v1337
        %v1594 = vunpack.c.h.b16 %v1334
        %v1595 = vunpack.c.h.b16 %v1335
        %v1596 = vunpack.c.h.b16 %v1336
        %v1597 = vunpack.c.h.b16 %v1337
        %v1598 = vunpack.c.l.b16 %v1338
        %v1599 = vunpack.c.l.b16 %v1339
        %v1600 = vunpack.c.l.b16 %v1340
        %v1601 = vunpack.c.l.b16 %v1341
        %v1602 = vunpack.c.h.b16 %v1338
        %v1603 = vunpack.c.h.b16 %v1339
        %v1604 = vunpack.c.h.b16 %v1340
        %v1605 = vunpack.c.h.b16 %v1341
        %v1606 = vunpack.c.l.b16 %v1342
        %v1607 = vunpack.c.l.b16 %v1343
        %v1608 = vunpack.c.l.b16 %v1344
        %v1609 = vunpack.c.l.b16 %v1345
        %v1610 = vunpack.c.h.b16 %v1342
        %v1611 = vunpack.c.h.b16 %v1343
        %v1612 = vunpack.c.h.b16 %v1344
        %v1613 = vunpack.c.h.b16 %v1345
        %v1614 = vunpack.c.l.b16 %v1346
        %v1615 = vunpack.c.l.b16 %v1347
        %v1616 = vunpack.c.l.b16 %v1348
        %v1617 = vunpack.c.l.b16 %v1349
        %v1618 = vunpack.c.h.b16 %v1346
        %v1619 = vunpack.c.h.b16 %v1347
        %v1620 = vunpack.c.h.b16 %v1348
        %v1621 = vunpack.c.h.b16 %v1349
        %v1622 = vunpack.c.l.b16 %v1350
        %v1623 = vunpack.c.l.b16 %v1351
        %v1624 = vunpack.c.l.b16 %v1352
        %v1625 = vunpack.c.l.b16 %v1353
        %v1626 = vunpack.c.h.b16 %v1350
        %v1627 = vunpack.c.h.b16 %v1351
        %v1628 = vunpack.c.h.b16 %v1352
        %v1629 = vunpack.c.h.b16 %v1353
        %v1630 = vunpack.c.l.b16 %v1354
        %v1631 = vunpack.c.l.b16 %v1355
        %v1632 = vunpack.c.l.b16 %v1356
        %v1633 = vunpack.c.l.b16 %v1357
        %v1634 = vunpack.c.h.b16 %v1354
        %v1635 = vunpack.c.h.b16 %v1355
        %v1636 = vunpack.c.h.b16 %v1356
        %v1637 = vunpack.c.h.b16 %v1357
        %v1638 = vunpack.c.l.b16 %v1358
        %v1639 = vunpack.c.l.b16 %v1359
        %v1640 = vunpack.c.l.b16 %v1360
        %v1641 = vunpack.c.l.b16 %v1361
        %v1642 = vunpack.c.h.b16 %v1358
        %v1643 = vunpack.c.h.b16 %v1359
        %v1644 = vunpack.c.h.b16 %v1360
        %v1645 = vunpack.c.h.b16 %v1361
        %v1646 = vunpack.c.l.b16 %v1362
        %v1647 = vunpack.c.l.b16 %v1363
        %v1648 = vunpack.c.l.b16 %v1364
        %v1649 = vunpack.c.l.b16 %v1365
        %v1650 = vunpack.c.h.b16 %v1362
        %v1651 = vunpack.c.h.b16 %v1363
        %v1652 = vunpack.c.h.b16 %v1364
        %v1653 = vunpack.c.h.b16 %v1365
        %v1654 = vunpack.c.l.b16 %v1366
        %v1655 = vunpack.c.l.b16 %v1367
        %v1656 = vunpack.c.l.b16 %v1368
        %v1657 = vunpack.c.l.b16 %v1369
        %v1658 = vunpack.c.h.b16 %v1366
        %v1659 = vunpack.c.h.b16 %v1367
        %v1660 = vunpack.c.h.b16 %v1368
        %v1661 = vunpack.c.h.b16 %v1369
        %v1662 = vunpack.c.l.b16 %v1370
        %v1663 = vunpack.c.l.b16 %v1371
        %v1664 = vunpack.c.l.b16 %v1372
        %v1665 = vunpack.c.l.b16 %v1373
        %v1666 = vunpack.c.h.b16 %v1370
        %v1667 = vunpack.c.h.b16 %v1371
        %v1668 = vunpack.c.h.b16 %v1372
        %v1669 = vunpack.c.h.b16 %v1373
        %v1670 = vunpack.c.l.b16 %v1374
        %v1671 = vunpack.c.l.b16 %v1375
        %v1672 = vunpack.c.l.b16 %v1376
        %v1673 = vunpack.c.l.b16 %v1377
        %v1674 = vunpack.c.h.b16 %v1374
        %v1675 = vunpack.c.h.b16 %v1375
        %v1676 = vunpack.c.h.b16 %v1376
        %v1677 = vunpack.c.h.b16 %v1377
        %v1678 = vunpack.c.l.b16 %v1378
        %v1679 = vunpack.c.l.b16 %v1379
        %v1680 = vunpack.c.l.b16 %v1380
        %v1681 = vunpack.c.l.b16 %v1381
        %v1682 = vunpack.c.h.b16 %v1378
        %v1683 = vunpack.c.h.b16 %v1379
        %v1684 = vunpack.c.h.b16 %v1380
        %v1685 = vunpack.c.h.b16 %v1381
        %v1686 = vunpack.c.l.b16 %v1382
        %v1687 = vunpack.c.l.b16 %v1383
        %v1688 = vunpack.c.l.b16 %v1384
        %v1689 = vunpack.c.l.b16 %v1385
        %v1690 = vunpack.c.h.b16 %v1382
        %v1691 = vunpack.c.h.b16 %v1383
        %v1692 = vunpack.c.h.b16 %v1384
        %v1693 = vunpack.c.h.b16 %v1385
        %v1694 = vunpack.c.l.b16 %v1386
        %v1695 = vunpack.c.l.b16 %v1387
        %v1696 = vunpack.c.l.b16 %v1388
        %v1697 = vunpack.c.l.b16 %v1389
        %v1698 = vunpack.c.h.b16 %v1386
        %v1699 = vunpack.c.h.b16 %v1387
        %v1700 = vunpack.c.h.b16 %v1388
        %v1701 = vunpack.c.h.b16 %v1389
        %v1702 = vunpack.c.l.b16 %v1390
        %v1703 = vunpack.c.l.b16 %v1391
        %v1704 = vunpack.c.l.b16 %v1392
        %v1705 = vunpack.c.l.b16 %v1393
        %v1706 = vunpack.c.h.b16 %v1390
        %v1707 = vunpack.c.h.b16 %v1391
        %v1708 = vunpack.c.h.b16 %v1392
        %v1709 = vunpack.c.h.b16 %v1393
        %v1710 = vunpack.c.l.b16 %v1394
        %v1711 = vunpack.c.l.b16 %v1395
        %v1712 = vunpack.c.l.b16 %v1396
        %v1713 = vunpack.c.l.b16 %v1397
        %v1714 = vunpack.c.h.b16 %v1394
        %v1715 = vunpack.c.h.b16 %v1395
        %v1716 = vunpack.c.h.b16 %v1396
        %v1717 = vunpack.c.h.b16 %v1397
        %v1718 = vunpack.c.l.b16 %v1398
        %v1719 = vunpack.c.l.b16 %v1399
        %v1720 = vunpack.c.l.b16 %v1400
        %v1721 = vunpack.c.l.b16 %v1401
        %v1722 = vunpack.c.h.b16 %v1398
        %v1723 = vunpack.c.h.b16 %v1399
        %v1724 = vunpack.c.h.b16 %v1400
        %v1725 = vunpack.c.h.b16 %v1401
        %v1726 = vunpack.c.l.b16 %v1402
        %v1727 = vunpack.c.l.b16 %v1403
        %v1728 = vunpack.c.l.b16 %v1404
        %v1729 = vunpack.c.l.b16 %v1405
        %v1730 = vunpack.c.h.b16 %v1402
        %v1731 = vunpack.c.h.b16 %v1403
        %v1732 = vunpack.c.h.b16 %v1404
        %v1733 = vunpack.c.h.b16 %v1405
        %v1734 = vunpack.c.l.b16 %v1406
        %v1735 = vunpack.c.l.b16 %v1407
        %v1736 = vunpack.c.l.b16 %v1408
        %v1737 = vunpack.c.l.b16 %v1409
        %v1738 = vunpack.c.h.b16 %v1406
        %v1739 = vunpack.c.h.b16 %v1407
        %v1740 = vunpack.c.h.b16 %v1408
        %v1741 = vunpack.c.h.b16 %v1409
        %v1742 = vunpack.c.l.b16 %v1410
        %v1743 = vunpack.c.l.b16 %v1411
        %v1744 = vunpack.c.l.b16 %v1412
        %v1745 = vunpack.c.l.b16 %v1413
        %v1746 = vunpack.c.h.b16 %v1410
        %v1747 = vunpack.c.h.b16 %v1411
        %v1748 = vunpack.c.h.b16 %v1412
        %v1749 = vunpack.c.h.b16 %v1413
        %v1750 = vunpack.c.l.b16 %v1414
        %v1751 = vunpack.c.l.b16 %v1415
        %v1752 = vunpack.c.l.b16 %v1416
        %v1753 = vunpack.c.l.b16 %v1417
        %v1754 = vunpack.c.h.b16 %v1414
        %v1755 = vunpack.c.h.b16 %v1415
        %v1756 = vunpack.c.h.b16 %v1416
        %v1757 = vunpack.c.h.b16 %v1417
        %v1758 = vunpack.c.l.b16 %v1418
        %v1759 = vunpack.c.l.b16 %v1419
        %v1760 = vunpack.c.l.b16 %v1420
        %v1761 = vunpack.c.l.b16 %v1421
        %v1762 = vunpack.c.h.b16 %v1418
        %v1763 = vunpack.c.h.b16 %v1419
        %v1764 = vunpack.c.h.b16 %v1420
        %v1765 = vunpack.c.h.b16 %v1421
        %v1766 = vunpack.c.l.b16 %v1422
        %v1767 = vunpack.c.l.b16 %v1423
        %v1768 = vunpack.c.l.b16 %v1424
        %v1769 = vunpack.c.l.b16 %v1425
        %v1770 = vunpack.c.h.b16 %v1422
        %v1771 = vunpack.c.h.b16 %v1423
        %v1772 = vunpack.c.h.b16 %v1424
        %v1773 = vunpack.c.h.b16 %v1425
        %v1774 = vunpack.c.l.b16 %v1426
        %v1775 = vunpack.c.l.b16 %v1427
        %v1776 = vunpack.c.l.b16 %v1428
        %v1777 = vunpack.c.l.b16 %v1429
        %v1778 = vunpack.c.h.b16 %v1426
        %v1779 = vunpack.c.h.b16 %v1427
        %v1780 = vunpack.c.h.b16 %v1428
        %v1781 = vunpack.c.h.b16 %v1429
        %v1782 = vunpack.c.l.b16 %v1430
        %v1783 = vunpack.c.l.b16 %v1431
        %v1784 = vunpack.c.l.b16 %v1432
        %v1785 = vunpack.c.l.b16 %v1433
        %v1786 = vunpack.c.h.b16 %v1430
        %v1787 = vunpack.c.h.b16 %v1431
        %v1788 = vunpack.c.h.b16 %v1432
        %v1789 = vunpack.c.h.b16 %v1433
        %v1790 = vunpack.c.l.b16 %v1434
        %v1791 = vunpack.c.l.b16 %v1435
        %v1792 = vunpack.c.l.b16 %v1436
        %v1793 = vunpack.c.l.b16 %v1437
        %v1794 = vunpack.c.h.b16 %v1434
        %v1795 = vunpack.c.h.b16 %v1435
        %v1796 = vunpack.c.h.b16 %v1436
        %v1797 = vunpack.c.h.b16 %v1437
        %v1798 = vunpack.c.l.b16 %v1438
        %v1799 = vunpack.c.l.b16 %v1439
        %v1800 = vunpack.c.l.b16 %v1440
        %v1801 = vunpack.c.l.b16 %v1441
        %v1802 = vunpack.c.h.b16 %v1438
        %v1803 = vunpack.c.h.b16 %v1439
        %v1804 = vunpack.c.h.b16 %v1440
        %v1805 = vunpack.c.h.b16 %v1441
        %v1806 = vunpack.c.l.b16 %v1442
        %v1807 = vunpack.c.l.b16 %v1443
        %v1808 = vunpack.c.l.b16 %v1444
        %v1809 = vunpack.c.l.b16 %v1445
        %v1810 = vunpack.c.h.b16 %v1442
        %v1811 = vunpack.c.h.b16 %v1443
        %v1812 = vunpack.c.h.b16 %v1444
        %v1813 = vunpack.c.h.b16 %v1445
        %v1814 = vunpack.c.l.b16 %v1446
        %v1815 = vunpack.c.l.b16 %v1447
        %v1816 = vunpack.c.l.b16 %v1448
        %v1817 = vunpack.c.l.b16 %v1449
        %v1818 = vunpack.c.h.b16 %v1446
        %v1819 = vunpack.c.h.b16 %v1447
        %v1820 = vunpack.c.h.b16 %v1448
        %v1821 = vunpack.c.h.b16 %v1449
        %v1822 = vunpack.c.l.b16 %v1450
        %v1823 = vunpack.c.l.b16 %v1451
        %v1824 = vunpack.c.l.b16 %v1452
        %v1825 = vunpack.c.l.b16 %v1453
        %v1826 = vunpack.c.h.b16 %v1450
        %v1827 = vunpack.c.h.b16 %v1451
        %v1828 = vunpack.c.h.b16 %v1452
        %v1829 = vunpack.c.h.b16 %v1453
        %v1830 = vunpack.c.l.b16 %v1454
        %v1831 = vunpack.c.l.b16 %v1455
        %v1832 = vunpack.c.l.b16 %v1456
        %v1833 = vunpack.c.l.b16 %v1457
        %v1834 = vunpack.c.h.b16 %v1454
        %v1835 = vunpack.c.h.b16 %v1455
        %v1836 = vunpack.c.h.b16 %v1456
        %v1837 = vunpack.c.h.b16 %v1457
        %v1838 = vunpack.c.l.b16 %v1458
        %v1839 = vunpack.c.l.b16 %v1459
        %v1840 = vunpack.c.l.b16 %v1460
        %v1841 = vunpack.c.l.b16 %v1461
        %v1842 = vunpack.c.h.b16 %v1458
        %v1843 = vunpack.c.h.b16 %v1459
        %v1844 = vunpack.c.h.b16 %v1460
        %v1845 = vunpack.c.h.b16 %v1461
        %v1846 = vpack.c.b16 %v1591, %v1590
        %v1847 = vpack.c.b16 %v1593, %v1592
        %v1848 = vpack.c.b16 %v1595, %v1594
        %v1849 = vpack.c.b16 %v1597, %v1596
        %v1850 = vpack.c.b16 %v1599, %v1598
        %v1851 = vpack.c.b16 %v1601, %v1600
        %v1852 = vpack.c.b16 %v1603, %v1602
        %v1853 = vpack.c.b16 %v1605, %v1604
        %v1854 = vpack.c.b16 %v1607, %v1606
        %v1855 = vpack.c.b16 %v1609, %v1608
        %v1856 = vpack.c.b16 %v1611, %v1610
        %v1857 = vpack.c.b16 %v1613, %v1612
        %v1858 = vpack.c.b16 %v1615, %v1614
        %v1859 = vpack.c.b16 %v1617, %v1616
        %v1860 = vpack.c.b16 %v1619, %v1618
        %v1861 = vpack.c.b16 %v1621, %v1620
        %v1862 = vpack.c.b16 %v1623, %v1622
        %v1863 = vpack.c.b16 %v1625, %v1624
        %v1864 = vpack.c.b16 %v1627, %v1626
        %v1865 = vpack.c.b16 %v1629, %v1628
        %v1866 = vpack.c.b16 %v1631, %v1630
        %v1867 = vpack.c.b16 %v1633, %v1632
        %v1868 = vpack.c.b16 %v1635, %v1634
        %v1869 = vpack.c.b16 %v1637, %v1636
        %v1870 = vpack.c.b16 %v1639, %v1638
        %v1871 = vpack.c.b16 %v1641, %v1640
        %v1872 = vpack.c.b16 %v1643, %v1642
        %v1873 = vpack.c.b16 %v1645, %v1644
        %v1874 = vpack.c.b16 %v1647, %v1646
        %v1875 = vpack.c.b16 %v1649, %v1648
        %v1876 = vpack.c.b16 %v1651, %v1650
        %v1877 = vpack.c.b16 %v1653, %v1652
        %v1878 = vpack.c.b16 %v1655, %v1654
        %v1879 = vpack.c.b16 %v1657, %v1656
        %v1880 = vpack.c.b16 %v1659, %v1658
        %v1881 = vpack.c.b16 %v1661, %v1660
        %v1882 = vpack.c.b16 %v1663, %v1662
        %v1883 = vpack.c.b16 %v1665, %v1664
        %v1884 = vpack.c.b16 %v1667, %v1666
        %v1885 = vpack.c.b16 %v1669, %v1668
        %v1886 = vpack.c.b16 %v1671, %v1670
        %v1887 = vpack.c.b16 %v1673, %v1672
        %v1888 = vpack.c.b16 %v1675, %v1674
        %v1889 = vpack.c.b16 %v1677, %v1676
        %v1890 = vpack.c.b16 %v1679, %v1678
        %v1891 = vpack.c.b16 %v1681, %v1680
        %v1892 = vpack.c.b16 %v1683, %v1682
        %v1893 = vpack.c.b16 %v1685, %v1684
        %v1894 = vpack.c.b16 %v1687, %v1686
        %v1895 = vpack.c.b16 %v1689, %v1688
        %v1896 = vpack.c.b16 %v1691, %v1690
        %v1897 = vpack.c.b16 %v1693, %v1692
        %v1898 = vpack.c.b16 %v1695, %v1694
        %v1899 = vpack.c.b16 %v1697, %v1696
        %v1900 = vpack.c.b16 %v1699, %v1698
        %v1901 = vpack.c.b16 %v1701, %v1700
        %v1902 = vpack.c.b16 %v1703, %v1702
        %v1903 = vpack.c.b16 %v1705, %v1704
        %v1904 = vpack.c.b16 %v1707, %v1706
        %v1905 = vpack.c.b16 %v1709, %v1708
        %v1906 = vpack.c.b16 %v1711, %v1710
        %v1907 = vpack.c.b16 %v1713, %v1712
        %v1908 = vpack.c.b16 %v1715, %v1714
        %v1909 = vpack.c.b16 %v1717, %v1716
        %v1910 = vpack.c.b16 %v1719, %v1718
        %v1911 = vpack.c.b16 %v1721, %v1720
        %v1912 = vpack.c.b16 %v1723, %v1722
        %v1913 = vpack.c.b16 %v1725, %v1724
        %v1914 = vpack.c.b16 %v1727, %v1726
        %v1915 = vpack.c.b16 %v1729, %v1728
        %v1916 = vpack.c.b16 %v1731, %v1730
        %v1917 = vpack.c.b16 %v1733, %v1732
        %v1918 = vpack.c.b16 %v1735, %v1734
        %v1919 = vpack.c.b16 %v1737, %v1736
        %v1920 = vpack.c.b16 %v1739, %v1738
        %v1921 = vpack.c.b16 %v1741, %v1740
        %v1922 = vpack.c.b16 %v1743, %v1742
        %v1923 = vpack.c.b16 %v1745, %v1744
        %v1924 = vpack.c.b16 %v1747, %v1746
        %v1925 = vpack.c.b16 %v1749, %v1748
        %v1926 = vpack.c.b16 %v1751, %v1750
        %v1927 = vpack.c.b16 %v1753, %v1752
        %v1928 = vpack.c.b16 %v1755, %v1754
        %v1929 = vpack.c.b16 %v1757, %v1756
        %v1930 = vpack.c.b16 %v1759, %v1758
        %v1931 = vpack.c.b16 %v1761, %v1760
        %v1932 = vpack.c.b16 %v1763, %v1762
        %v1933 = vpack.c.b16 %v1765, %v1764
        %v1934 = vpack.c.b16 %v1767, %v1766
        %v1935 = vpack.c.b16 %v1769, %v1768
        %v1936 = vpack.c.b16 %v1771, %v1770
        %v1937 = vpack.c.b16 %v1773, %v1772
        %v1938 = vpack.c.b16 %v1775, %v1774
        %v1939 = vpack.c.b16 %v1777, %v1776
        %v1940 = vpack.c.b16 %v1779, %v1778
        %v1941 = vpack.c.b16 %v1781, %v1780
        %v1942 = vpack.c.b16 %v1783, %v1782
        %v1943 = vpack.c.b16 %v1785, %v1784
        %v1944 = vpack.c.b16 %v1787, %v1786
        %v1945 = vpack.c.b16 %v1789, %v1788
        %v1946 = vpack.c.b16 %v1791, %v1790
        %v1947 = vpack.c.b16 %v1793, %v1792
        %v1948 = vpack.c.b16 %v1795, %v1794
        %v1949 = vpack.c.b16 %v1797, %v1796
        %v1950 = vpack.c.b16 %v1799, %v1798
        %v1951 = vpack.c.b16 %v1801, %v1800
        %v1952 = vpack.c.b16 %v1803, %v1802
        %v1953 = vpack.c.b16 %v1805, %v1804
        %v1954 = vpack.c.b16 %v1807, %v1806
        %v1955 = vpack.c.b16 %v1809, %v1808
        %v1956 = vpack.c.b16 %v1811, %v1810
        %v1957 = vpack.c.b16 %v1813, %v1812
        %v1958 = vpack.c.b16 %v1815, %v1814
        %v1959 = vpack.c.b16 %v1817, %v1816
        %v1960 = vpack.c.b16 %v1819, %v1818
        %v1961 = vpack.c.b16 %v1821, %v1820
        %v1962 = vpack.c.b16 %v1823, %v1822
        %v1963 = vpack.c.b16 %v1825, %v1824
        %v1964 = vpack.c.b16 %v1827, %v1826
        %v1965 = vpack.c.b16 %v1829, %v1828
        %v1966 = vpack.c.b16 %v1831, %v1830
        %v1967 = vpack.c.b16 %v1833, %v1832
        %v1968 = vpack.c.b16 %v1835, %v1834
        %v1969 = vpack.c.b16 %v1837, %v1836
        %v1970 = vpack.c.b16 %v1839, %v1838
        %v1971 = vpack.c.b16 %v1841, %v1840
        %v1972 = vpack.c.b16 %v1843, %v1842
        %v1973 = vpack.c.b16 %v1845, %v1844
        %2102 = vst [vmem:[%s176] sm:$0xff] %v1846
        %2103 = vst [vmem:[%s176 + $0x8] sm:$0xff] %v1847
        %2104 = vst [vmem:[%s176 + $0x10] sm:$0xff] %v1848
        %2105 = vst [vmem:[%s176 + $0x18] sm:$0xff] %v1849
        %2106 = vst [vmem:[%s176 + $0x20] sm:$0xff] %v1850
        %2107 = vst [vmem:[%s176 + $0x28] sm:$0xff] %v1851
        %2108 = vst [vmem:[%s176 + $0x30] sm:$0xff] %v1852
        %2109 = vst [vmem:[%s176 + $0x38] sm:$0xff] %v1853
        %2110 = vst [vmem:[%s176 + $0x40] sm:$0xff] %v1854
        %2111 = vst [vmem:[%s176 + $0x48] sm:$0xff] %v1855
        %2112 = vst [vmem:[%s176 + $0x50] sm:$0xff] %v1856
        %2113 = vst [vmem:[%s176 + $0x58] sm:$0xff] %v1857
        %2114 = vst [vmem:[%s176 + $0x60] sm:$0xff] %v1858
        %2115 = vst [vmem:[%s176 + $0x68] sm:$0xff] %v1859
        %2116 = vst [vmem:[%s176 + $0x70] sm:$0xff] %v1860
        %2117 = vst [vmem:[%s176 + $0x78] sm:$0xff] %v1861
        %2118 = vst [vmem:[%s176 + $0x80] sm:$0xff] %v1862
        %2119 = vst [vmem:[%s176 + $0x88] sm:$0xff] %v1863
        %2120 = vst [vmem:[%s176 + $0x90] sm:$0xff] %v1864
        %2121 = vst [vmem:[%s176 + $0x98] sm:$0xff] %v1865
        %2122 = vst [vmem:[%s176 + $0xa0] sm:$0xff] %v1866
        %2123 = vst [vmem:[%s176 + $0xa8] sm:$0xff] %v1867
        %2124 = vst [vmem:[%s176 + $0xb0] sm:$0xff] %v1868
        %2125 = vst [vmem:[%s176 + $0xb8] sm:$0xff] %v1869
        %2126 = vst [vmem:[%s176 + $0xc0] sm:$0xff] %v1870
        %2127 = vst [vmem:[%s176 + $0xc8] sm:$0xff] %v1871
        %2128 = vst [vmem:[%s176 + $0xd0] sm:$0xff] %v1872
        %2129 = vst [vmem:[%s176 + $0xd8] sm:$0xff] %v1873
        %2130 = vst [vmem:[%s176 + $0xe0] sm:$0xff] %v1874
        %2131 = vst [vmem:[%s176 + $0xe8] sm:$0xff] %v1875
        %2132 = vst [vmem:[%s176 + $0xf0] sm:$0xff] %v1876
        %2133 = vst [vmem:[%s176 + $0xf8] sm:$0xff] %v1877
        %2134 = vst [vmem:[%s176 + $0x100] sm:$0xff] %v1878
        %2135 = vst [vmem:[%s176 + $0x108] sm:$0xff] %v1879
        %2136 = vst [vmem:[%s176 + $0x110] sm:$0xff] %v1880
        %2137 = vst [vmem:[%s176 + $0x118] sm:$0xff] %v1881
        %2138 = vst [vmem:[%s176 + $0x120] sm:$0xff] %v1882
        %2139 = vst [vmem:[%s176 + $0x128] sm:$0xff] %v1883
        %2140 = vst [vmem:[%s176 + $0x130] sm:$0xff] %v1884
        %2141 = vst [vmem:[%s176 + $0x138] sm:$0xff] %v1885
        %2142 = vst [vmem:[%s176 + $0x140] sm:$0xff] %v1886
        %2143 = vst [vmem:[%s176 + $0x148] sm:$0xff] %v1887
        %2144 = vst [vmem:[%s176 + $0x150] sm:$0xff] %v1888
        %2145 = vst [vmem:[%s176 + $0x158] sm:$0xff] %v1889
        %2146 = vst [vmem:[%s176 + $0x160] sm:$0xff] %v1890
        %2147 = vst [vmem:[%s176 + $0x168] sm:$0xff] %v1891
        %2148 = vst [vmem:[%s176 + $0x170] sm:$0xff] %v1892
        %2149 = vst [vmem:[%s176 + $0x178] sm:$0xff] %v1893
        %2150 = vst [vmem:[%s176 + $0x180] sm:$0xff] %v1894
        %2151 = vst [vmem:[%s176 + $0x188] sm:$0xff] %v1895
        %2152 = vst [vmem:[%s176 + $0x190] sm:$0xff] %v1896
        %2153 = vst [vmem:[%s176 + $0x198] sm:$0xff] %v1897
        %2154 = vst [vmem:[%s176 + $0x1a0] sm:$0xff] %v1898
        %2155 = vst [vmem:[%s176 + $0x1a8] sm:$0xff] %v1899
        %2156 = vst [vmem:[%s176 + $0x1b0] sm:$0xff] %v1900
        %2157 = vst [vmem:[%s176 + $0x1b8] sm:$0xff] %v1901
        %2158 = vst [vmem:[%s176 + $0x1c0] sm:$0xff] %v1902
        %2159 = vst [vmem:[%s176 + $0x1c8] sm:$0xff] %v1903
        %2160 = vst [vmem:[%s176 + $0x1d0] sm:$0xff] %v1904
        %2161 = vst [vmem:[%s176 + $0x1d8] sm:$0xff] %v1905
        %2162 = vst [vmem:[%s176 + $0x1e0] sm:$0xff] %v1906
        %2163 = vst [vmem:[%s176 + $0x1e8] sm:$0xff] %v1907
        %2164 = vst [vmem:[%s176 + $0x1f0] sm:$0xff] %v1908
        %2165 = vst [vmem:[%s176 + $0x1f8] sm:$0xff] %v1909
        %2166 = vst [vmem:[%s176 + $0x200] sm:$0xff] %v1910
        %2167 = vst [vmem:[%s176 + $0x208] sm:$0xff] %v1911
        %2168 = vst [vmem:[%s176 + $0x210] sm:$0xff] %v1912
        %2169 = vst [vmem:[%s176 + $0x218] sm:$0xff] %v1913
        %2170 = vst [vmem:[%s176 + $0x220] sm:$0xff] %v1914
        %2171 = vst [vmem:[%s176 + $0x228] sm:$0xff] %v1915
        %2172 = vst [vmem:[%s176 + $0x230] sm:$0xff] %v1916
        %2173 = vst [vmem:[%s176 + $0x238] sm:$0xff] %v1917
        %2174 = vst [vmem:[%s176 + $0x240] sm:$0xff] %v1918
        %2175 = vst [vmem:[%s176 + $0x248] sm:$0xff] %v1919
        %2176 = vst [vmem:[%s176 + $0x250] sm:$0xff] %v1920
        %2177 = vst [vmem:[%s176 + $0x258] sm:$0xff] %v1921
        %2178 = vst [vmem:[%s176 + $0x260] sm:$0xff] %v1922
        %2179 = vst [vmem:[%s176 + $0x268] sm:$0xff] %v1923
        %2180 = vst [vmem:[%s176 + $0x270] sm:$0xff] %v1924
        %2181 = vst [vmem:[%s176 + $0x278] sm:$0xff] %v1925
        %2182 = vst [vmem:[%s176 + $0x280] sm:$0xff] %v1926
        %2183 = vst [vmem:[%s176 + $0x288] sm:$0xff] %v1927
        %2184 = vst [vmem:[%s176 + $0x290] sm:$0xff] %v1928
        %2185 = vst [vmem:[%s176 + $0x298] sm:$0xff] %v1929
        %2186 = vst [vmem:[%s176 + $0x2a0] sm:$0xff] %v1930
        %2187 = vst [vmem:[%s176 + $0x2a8] sm:$0xff] %v1931
        %2188 = vst [vmem:[%s176 + $0x2b0] sm:$0xff] %v1932
        %2189 = vst [vmem:[%s176 + $0x2b8] sm:$0xff] %v1933
        %2190 = vst [vmem:[%s176 + $0x2c0] sm:$0xff] %v1934
        %2191 = vst [vmem:[%s176 + $0x2c8] sm:$0xff] %v1935
        %2192 = vst [vmem:[%s176 + $0x2d0] sm:$0xff] %v1936
        %2193 = vst [vmem:[%s176 + $0x2d8] sm:$0xff] %v1937
        %2194 = vst [vmem:[%s176 + $0x2e0] sm:$0xff] %v1938
        %2195 = vst [vmem:[%s176 + $0x2e8] sm:$0xff] %v1939
        %2196 = vst [vmem:[%s176 + $0x2f0] sm:$0xff] %v1940
        %2197 = vst [vmem:[%s176 + $0x2f8] sm:$0xff] %v1941
        %2198 = vst [vmem:[%s176 + $0x300] sm:$0xff] %v1942
        %2199 = vst [vmem:[%s176 + $0x308] sm:$0xff] %v1943
        %2200 = vst [vmem:[%s176 + $0x310] sm:$0xff] %v1944
        %2201 = vst [vmem:[%s176 + $0x318] sm:$0xff] %v1945
        %2202 = vst [vmem:[%s176 + $0x320] sm:$0xff] %v1946
        %2203 = vst [vmem:[%s176 + $0x328] sm:$0xff] %v1947
        %2204 = vst [vmem:[%s176 + $0x330] sm:$0xff] %v1948
        %2205 = vst [vmem:[%s176 + $0x338] sm:$0xff] %v1949
        %2206 = vst [vmem:[%s176 + $0x340] sm:$0xff] %v1950
        %2207 = vst [vmem:[%s176 + $0x348] sm:$0xff] %v1951
        %2208 = vst [vmem:[%s176 + $0x350] sm:$0xff] %v1952
        %2209 = vst [vmem:[%s176 + $0x358] sm:$0xff] %v1953
        %2210 = vst [vmem:[%s176 + $0x360] sm:$0xff] %v1954
        %2211 = vst [vmem:[%s176 + $0x368] sm:$0xff] %v1955
        %2212 = vst [vmem:[%s176 + $0x370] sm:$0xff] %v1956
        %2213 = vst [vmem:[%s176 + $0x378] sm:$0xff] %v1957
        %2214 = vst [vmem:[%s176 + $0x380] sm:$0xff] %v1958
        %2215 = vst [vmem:[%s176 + $0x388] sm:$0xff] %v1959
        %2216 = vst [vmem:[%s176 + $0x390] sm:$0xff] %v1960
        %2217 = vst [vmem:[%s176 + $0x398] sm:$0xff] %v1961
        %2218 = vst [vmem:[%s176 + $0x3a0] sm:$0xff] %v1962
        %2219 = vst [vmem:[%s176 + $0x3a8] sm:$0xff] %v1963
        %2220 = vst [vmem:[%s176 + $0x3b0] sm:$0xff] %v1964
        %2221 = vst [vmem:[%s176 + $0x3b8] sm:$0xff] %v1965
        %2222 = vst [vmem:[%s176 + $0x3c0] sm:$0xff] %v1966
        %2223 = vst [vmem:[%s176 + $0x3c8] sm:$0xff] %v1967
        %2224 = vst [vmem:[%s176 + $0x3d0] sm:$0xff] %v1968
        %2225 = vst [vmem:[%s176 + $0x3d8] sm:$0xff] %v1969
        %2226 = vst [vmem:[%s176 + $0x3e0] sm:$0xff] %v1970
        %2227 = vst [vmem:[%s176 + $0x3e8] sm:$0xff] %v1971
        %2228 = vst [vmem:[%s176 + $0x3f0] sm:$0xff] %v1972
        %2229 = vst [vmem:[%s176 + $0x3f8] sm:$0xff] %v1973
        %s2230 = sand.u32 %s75, 1
        %s2231 = scalar_lea.sflag [#allocation4], %s2230
        %s2232 = sand.u32 %s75, 1
        %s2233 = smul.addr %s2232, 1024
        %s2234 = scalar_lea.vmem [#allocation7], %s2233
        // Predicated region
        $region37: #{tpu_custom_call.1} parent=27 // pred_check
          %p2235 = pneg %p85
        $region38: #{tpu_custom_call.1} parent=27 // pred_check_branch
          %2237 = sbr.rel (%p2235) target = $region40
        $region39: #{tpu_custom_call.1} parent=27 // pred_region
          %s2238 = smul.u32 64, %s20
          %s2240 = ssub.s32 16384, 16384
          %2241 = vsyncadd %s2231, %s2240
          %s2242 = smul.addr %s2238, 4
          %s2243 = smul.addr %s2242, 64
          %s2244 = scalar_lea.hbm %s2, %s2243
          %s2245 = sshll.u32 %s2234, 4
          %s2246 = int_to_ptr.vmem [resolvable:$true] %s2245
          %2251 = dma.vmem_to_hbm [thread:$0]  %s2246, 16384, %s2244, %s2231, 256, 256, 16
        $region40: #{tpu_custom_call.1} parent=27 // pred_fallthru
          _
      $region28: #{tpu_custom_call.1} parent=5 // pred_fallthru
        _
      %p2252 = scmp.le.s32.totalorder 2, %s15
      // Predicated region
      $region41: #{tpu_custom_call.1} parent=5 // pred_check
        %p2253 = pneg %p2252
      $region42: #{tpu_custom_call.1} parent=5 // pred_check_branch
        %2255 = sbr.rel (%p2253) target = $region44
      $region43: #{tpu_custom_call.1} parent=5 // pred_region
        %s2256 = ssub.s32 %s15, 2
        // Predicated region
        $region45: #{tpu_custom_call.1} parent=43 // pred_check
          %p2257 = pneg %p91
        $region46: #{tpu_custom_call.1} parent=43 // pred_check_branch
          %2259 = sbr.rel (%p2257) target = $region48
        $region47: #{tpu_custom_call.1} parent=43 // pred_region
          %s2260 = sand.u32 %s76, 1
          %s2261 = scalar_lea.sflag [#allocation4], %s2260
          %s2262 = sand.u32 %s76, 1
          %s2263 = smul.addr %s2262, 1024
          %s2264 = scalar_lea.vmem [#allocation7], %s2263
          %2265 = dma.done %s2261, 16384
        $region48: #{tpu_custom_call.1} parent=43 // pred_fallthru
          _
      $region44: #{tpu_custom_call.1} parent=5 // pred_fallthru
        _
    $region6: #{tpu_custom_call.1} parent=1 // loop_footer
      %s19 = sadd.s32 1, %s15
    $region7: #{tpu_custom_call.1} parent=1 // loop_footer_branch
      %14 = sbr.rel target = $region3
    $region8: #{tpu_custom_call.1} parent=1 // loop_exit
      _
    %2266 = vsyncpa [#allocation3], 1
    %s2267 = scalar_lea.sflag [#allocation3], 1
    %2268 = vsyncpa %s2267, 1
    %2269 = vsyncpa [#allocation6], 1
    %2270 = vsyncpa [#allocation4], 1
    %s2271 = scalar_lea.sflag [#allocation4], 1
    %2272 = vsyncpa %s2271, 1

</llo_original>
